<compile_context>
chip_gen: v7x
topology: tpu7x:2x2x1
jax: 0.10.0
libtpu: 0.0.40
codegen_flags: <defaults>
</compile_context>

<pallas_src>
import functools

import jax
import jax.numpy as jnp
from jax.experimental import pallas as pl
from jax.experimental.pallas import tpu as pltpu


# -----------------------------------------------------------------------------
# Pallas kernel: full OuterMean forward for one batch element.
# -----------------------------------------------------------------------------
def _outer_mean_kernel(x_ref, gamma_ref, beta_ref, wl_ref, bl_ref, wr_ref,
                       br_ref, wo_ref, bo_ref, o_ref, *, ln_eps):
    # x_ref : (1, M, N, D)     o_ref : (1, N, N, D)
    # gamma/beta : (1, D); wl/wr : (D, H); bl/br : (1, H); wo : (H, D); bo : (1, D)
    x = x_ref[0].astype(jnp.float32)                        # [M, N, D]
    M, N, D = x.shape
    H = wl_ref.shape[1]

    # LayerNorm over D (PyTorch nn.LayerNorm: biased variance, eps inside rsqrt).
    mu = jnp.mean(x, axis=-1, keepdims=True)
    var = jnp.mean((x - mu) ** 2, axis=-1, keepdims=True)
    xn = (x - mu) * jax.lax.rsqrt(var + ln_eps)
    xn = xn * gamma_ref[...] + beta_ref[...]                # (1, D) broadcasts

    # Input projections: one MXU matmul each over the flattened [M*N, D] slab.
    xn2 = xn.reshape(M * N, D)
    left = jnp.dot(xn2, wl_ref[...], preferred_element_type=jnp.float32)
    left = (left + bl_ref[...]).reshape(M, N, H)
    right = jnp.dot(xn2, wr_ref[...], preferred_element_type=jnp.float32)
    right = (right + br_ref[...]).reshape(M, N, H)

    # Outer-product mean over m, accumulated in VMEM: outer[i, j, h].
    acc = jnp.zeros((N, N, H), jnp.float32)
    for m in range(M):                                      # M is static (block shape)
        acc = acc + left[m][:, None, :] * right[m][None, :, :]
    outer = acc * (1.0 / M)

    # Fused output projection on the MXU: [N*N, H] @ [H, D].
    out = jnp.dot(outer.reshape(N * N, H), wo_ref[...],
                  preferred_element_type=jnp.float32) + bo_ref[...]
    o_ref[0] = out.reshape(N, N, D).astype(o_ref.dtype)


# -----------------------------------------------------------------------------
# Wrapper: one pallas_call, zero wrapper compute (only free bias reshapes).
# -----------------------------------------------------------------------------
def outer_mean_forward(params, x, *, ln_eps=1e-5):
    B, M, N, D = x.shape
    H = params["w_left"].shape[1]

    gamma = params["ln_gamma"].reshape(1, D)
    beta = params["ln_beta"].reshape(1, D)
    bl = params["b_left"].reshape(1, H)
    br = params["b_right"].reshape(1, H)
    bo = params["b_out"].reshape(1, D)

    kernel = functools.partial(_outer_mean_kernel, ln_eps=ln_eps)
    return pl.pallas_call(
        kernel,
        out_shape=jax.ShapeDtypeStruct((B, N, N, D), x.dtype),
        grid=(B,),
        in_specs=[
            pl.BlockSpec((1, M, N, D), lambda b: (b, 0, 0, 0)),   # x
            pl.BlockSpec((1, D), lambda b: (0, 0)),               # LN gamma
            pl.BlockSpec((1, D), lambda b: (0, 0)),               # LN beta
            pl.BlockSpec((D, H), lambda b: (0, 0)),               # W_left
            pl.BlockSpec((1, H), lambda b: (0, 0)),               # b_left
            pl.BlockSpec((D, H), lambda b: (0, 0)),               # W_right
            pl.BlockSpec((1, H), lambda b: (0, 0)),               # b_right
            pl.BlockSpec((H, D), lambda b: (0, 0)),               # W_out
            pl.BlockSpec((1, D), lambda b: (0, 0)),               # b_out
        ],
        out_specs=pl.BlockSpec((1, N, N, D), lambda b: (b, 0, 0, 0)),
        compiler_params=pltpu.CompilerParams(
            dimension_semantics=("parallel",)),
    )(x, gamma, beta, params["w_left"], bl, params["w_right"], br,
      params["w_out"], bo)


# -----------------------------------------------------------------------------
# Pure-JAX reference (mirrors the PyTorch forward, mask=None path).
# -----------------------------------------------------------------------------
def reference_forward(params, x, *, ln_eps=1e-5):
    hp = jax.lax.Precision.HIGHEST
    mu = x.mean(-1, keepdims=True)
    var = ((x - mu) ** 2).mean(-1, keepdims=True)
    xn = (x - mu) / jnp.sqrt(var + ln_eps)
    xn = xn * params["ln_gamma"] + params["ln_beta"]
    left = jnp.dot(xn, params["w_left"], precision=hp) + params["b_left"]
    right = jnp.dot(xn, params["w_right"], precision=hp) + params["b_right"]
    outer = (left[:, :, :, None, :] * right[:, :, None, :, :]).mean(axis=1)
    return jnp.dot(outer, params["w_out"], precision=hp) + params["b_out"]


if __name__ == "__main__":
    B, M, N, D = 2, 4, 16, 32
    H = D  # hidden_dim defaults to dim in the PyTorch module

    key = jax.random.PRNGKey(0)
    ks = jax.random.split(key, 9)
    params = {
        "ln_gamma": 1.0 + 0.1 * jax.random.normal(ks[0], (D,), jnp.float32),
        "ln_beta": 0.1 * jax.random.normal(ks[1], (D,), jnp.float32),
        "w_left": jax.random.normal(ks[2], (D, H), jnp.float32) / (D ** 0.5),
        "b_left": 0.1 * jax.random.normal(ks[3], (H,), jnp.float32),
        "w_right": jax.random.normal(ks[4], (D, H), jnp.float32) / (D ** 0.5),
        "b_right": 0.1 * jax.random.normal(ks[5], (H,), jnp.float32),
        "w_out": jax.random.normal(ks[6], (H, D), jnp.float32) / (H ** 0.5),
        "b_out": 0.1 * jax.random.normal(ks[7], (D,), jnp.float32),
    }
    x = jax.random.normal(ks[8], (B, M, N, D), jnp.float32)

    out = outer_mean_forward(params, x)
    out = jax.block_until_ready(out)

    ref = reference_forward(params, x)
    assert out.shape == (B, N, N, D)
    err = jnp.max(jnp.abs(out - ref))
    assert jnp.allclose(out, ref, atol=1e-3, rtol=1e-3), f"max abs err {err}"
    print("KERNEL_OK")
</pallas_src>

<mosaic_0001>
module attributes {stable_mosaic.version = 11 : i64} {
  func.func @_outer_mean_kernel(%arg0: i32, %arg1: memref<1x4x16x32xf32, #tpu.memory_space<vmem>>, %arg2: memref<1x32xf32, #tpu.memory_space<vmem>>, %arg3: memref<1x32xf32, #tpu.memory_space<vmem>>, %arg4: memref<32x32xf32, #tpu.memory_space<vmem>>, %arg5: memref<1x32xf32, #tpu.memory_space<vmem>>, %arg6: memref<32x32xf32, #tpu.memory_space<vmem>>, %arg7: memref<1x32xf32, #tpu.memory_space<vmem>>, %arg8: memref<32x32xf32, #tpu.memory_space<vmem>>, %arg9: memref<1x32xf32, #tpu.memory_space<vmem>>, %arg10: memref<1x16x16x32xf32, #tpu.memory_space<vmem>>) attributes {dimension_semantics = [#tpu.dimension_semantics<parallel>], iteration_bounds = array<i64: 2>, scalar_prefetch = 0 : i64, scratch_operands = 0 : i64, tpu.core_type = #tpu.core_type<tc>, window_params = [{transform_indices = @transform_0, window_bounds = array<i64: 1, 4, 16, 32>}, {pipeline_mode = #tpu.pipeline_mode<synchronous>, transform_indices = @transform_1, window_bounds = array<i64: 1, 32>}, {pipeline_mode = #tpu.pipeline_mode<synchronous>, transform_indices = @transform_2, window_bounds = array<i64: 1, 32>}, {pipeline_mode = #tpu.pipeline_mode<synchronous>, transform_indices = @transform_3, window_bounds = array<i64: 32, 32>}, {pipeline_mode = #tpu.pipeline_mode<synchronous>, transform_indices = @transform_4, window_bounds = array<i64: 1, 32>}, {pipeline_mode = #tpu.pipeline_mode<synchronous>, transform_indices = @transform_5, window_bounds = array<i64: 32, 32>}, {pipeline_mode = #tpu.pipeline_mode<synchronous>, transform_indices = @transform_6, window_bounds = array<i64: 1, 32>}, {pipeline_mode = #tpu.pipeline_mode<synchronous>, transform_indices = @transform_7, window_bounds = array<i64: 32, 32>}, {pipeline_mode = #tpu.pipeline_mode<synchronous>, transform_indices = @transform_8, window_bounds = array<i64: 1, 32>}, {transform_indices = @transform_9, window_bounds = array<i64: 1, 16, 16, 32>}]} {
    %c0 = arith.constant 0 : index
    %c0_0 = arith.constant 0 : index
    %c0_1 = arith.constant 0 : index
    %c0_2 = arith.constant 0 : index
    %0 = vector.load %arg1[%c0, %c0_0, %c0_1, %c0_2] : memref<1x4x16x32xf32, #tpu.memory_space<vmem>>, vector<1x4x16x32xf32>
    %1 = vector.shape_cast %0 : vector<1x4x16x32xf32> to vector<4x16x32xf32>
    %cst = arith.constant dense<0.000000e+00> : vector<4x16xf32>
    %2 = vector.multi_reduction <add>, %1, %cst [2] : vector<4x16x32xf32> to vector<4x16xf32>
    %3 = vector.shape_cast %2 : vector<4x16xf32> to vector<4x16x1xf32>
    %cst_3 = arith.constant 3.200000e+01 : f32
    %4 = vector.broadcast %cst_3 : f32 to vector<4x16x1xf32>
    %5 = arith.divf %3, %4 : vector<4x16x1xf32>
    %6 = vector.broadcast %5 : vector<4x16x1xf32> to vector<4x16x32xf32>
    %7 = arith.subf %1, %6 : vector<4x16x32xf32>
    %8 = arith.mulf %7, %7 : vector<4x16x32xf32>
    %cst_4 = arith.constant dense<0.000000e+00> : vector<4x16xf32>
    %9 = vector.multi_reduction <add>, %8, %cst_4 [2] : vector<4x16x32xf32> to vector<4x16xf32>
    %10 = vector.shape_cast %9 : vector<4x16xf32> to vector<4x16x1xf32>
    %cst_5 = arith.constant 3.200000e+01 : f32
    %11 = vector.broadcast %cst_5 : f32 to vector<4x16x1xf32>
    %12 = arith.divf %10, %11 : vector<4x16x1xf32>
    %13 = vector.broadcast %5 : vector<4x16x1xf32> to vector<4x16x32xf32>
    %14 = arith.subf %1, %13 : vector<4x16x32xf32>
    %cst_6 = arith.constant 9.99999974E-6 : f32
    %15 = vector.broadcast %cst_6 : f32 to vector<4x16x1xf32>
    %16 = arith.addf %12, %15 : vector<4x16x1xf32>
    %17 = math.rsqrt %16 : vector<4x16x1xf32>
    %18 = vector.broadcast %17 : vector<4x16x1xf32> to vector<4x16x32xf32>
    %19 = arith.mulf %14, %18 : vector<4x16x32xf32>
    %c0_7 = arith.constant 0 : index
    %c0_8 = arith.constant 0 : index
    %20 = vector.load %arg2[%c0_7, %c0_8] : memref<1x32xf32, #tpu.memory_space<vmem>>, vector<1x32xf32>
    %21 = vector.shape_cast %20 : vector<1x32xf32> to vector<1x1x32xf32>
    %22 = vector.broadcast %21 : vector<1x1x32xf32> to vector<4x16x32xf32>
    %23 = arith.mulf %19, %22 : vector<4x16x32xf32>
    %c0_9 = arith.constant 0 : index
    %c0_10 = arith.constant 0 : index
    %24 = vector.load %arg3[%c0_9, %c0_10] : memref<1x32xf32, #tpu.memory_space<vmem>>, vector<1x32xf32>
    %25 = vector.shape_cast %24 : vector<1x32xf32> to vector<1x1x32xf32>
    %26 = vector.broadcast %25 : vector<1x1x32xf32> to vector<4x16x32xf32>
    %27 = arith.addf %23, %26 : vector<4x16x32xf32>
    %28 = vector.shape_cast %27 : vector<4x16x32xf32> to vector<64x32xf32>
    %c0_11 = arith.constant 0 : index
    %c0_12 = arith.constant 0 : index
    %29 = vector.load %arg4[%c0_11, %c0_12] : memref<32x32xf32, #tpu.memory_space<vmem>>, vector<32x32xf32>
    %cst_13 = arith.constant dense<0.000000e+00> : vector<64x32xf32>
    %30 = tpu.matmul %28, %29, %cst_13 {dimension_numbers = #tpu.dot_dimension_numbers<[1], [0], [0], [1], [0, 0, 1, 1], [], []>} : vector<64x32xf32>, vector<32x32xf32>, vector<64x32xf32> -> vector<64x32xf32>
    %c0_14 = arith.constant 0 : index
    %c0_15 = arith.constant 0 : index
    %31 = vector.load %arg5[%c0_14, %c0_15] : memref<1x32xf32, #tpu.memory_space<vmem>>, vector<1x32xf32>
    %32 = vector.broadcast %31 : vector<1x32xf32> to vector<64x32xf32>
    %33 = arith.addf %30, %32 : vector<64x32xf32>
    %34 = vector.shape_cast %33 : vector<64x32xf32> to vector<4x16x32xf32>
    %c0_16 = arith.constant 0 : index
    %c0_17 = arith.constant 0 : index
    %35 = vector.load %arg6[%c0_16, %c0_17] : memref<32x32xf32, #tpu.memory_space<vmem>>, vector<32x32xf32>
    %cst_18 = arith.constant dense<0.000000e+00> : vector<64x32xf32>
    %36 = tpu.matmul %28, %35, %cst_18 {dimension_numbers = #tpu.dot_dimension_numbers<[1], [0], [0], [1], [0, 0, 1, 1], [], []>} : vector<64x32xf32>, vector<32x32xf32>, vector<64x32xf32> -> vector<64x32xf32>
    %c0_19 = arith.constant 0 : index
    %c0_20 = arith.constant 0 : index
    %37 = vector.load %arg7[%c0_19, %c0_20] : memref<1x32xf32, #tpu.memory_space<vmem>>, vector<1x32xf32>
    %38 = vector.broadcast %37 : vector<1x32xf32> to vector<64x32xf32>
    %39 = arith.addf %36, %38 : vector<64x32xf32>
    %40 = vector.shape_cast %39 : vector<64x32xf32> to vector<4x16x32xf32>
    %cst_21 = arith.constant 0.000000e+00 : f32
    %41 = vector.broadcast %cst_21 : f32 to vector<16x16x32xf32>
    %42 = vector.extract_strided_slice %34 {offsets = [0, 0, 0], sizes = [1, 16, 32], strides = [1, 1, 1]} : vector<4x16x32xf32> to vector<1x16x32xf32>
    %43 = vector.shape_cast %42 : vector<1x16x32xf32> to vector<16x32xf32>
    %44 = vector.shape_cast %43 : vector<16x32xf32> to vector<16x1x32xf32>
    %45 = vector.extract_strided_slice %40 {offsets = [0, 0, 0], sizes = [1, 16, 32], strides = [1, 1, 1]} : vector<4x16x32xf32> to vector<1x16x32xf32>
    %46 = vector.shape_cast %45 : vector<1x16x32xf32> to vector<16x32xf32>
    %47 = vector.shape_cast %46 : vector<16x32xf32> to vector<1x16x32xf32>
    %48 = vector.broadcast %44 : vector<16x1x32xf32> to vector<16x16x32xf32>
    %49 = vector.broadcast %47 : vector<1x16x32xf32> to vector<16x16x32xf32>
    %50 = arith.mulf %48, %49 : vector<16x16x32xf32>
    %51 = arith.addf %41, %50 : vector<16x16x32xf32>
    %52 = vector.extract_strided_slice %34 {offsets = [1, 0, 0], sizes = [1, 16, 32], strides = [1, 1, 1]} : vector<4x16x32xf32> to vector<1x16x32xf32>
    %53 = vector.shape_cast %52 : vector<1x16x32xf32> to vector<16x32xf32>
    %54 = vector.shape_cast %53 : vector<16x32xf32> to vector<16x1x32xf32>
    %55 = vector.extract_strided_slice %40 {offsets = [1, 0, 0], sizes = [1, 16, 32], strides = [1, 1, 1]} : vector<4x16x32xf32> to vector<1x16x32xf32>
    %56 = vector.shape_cast %55 : vector<1x16x32xf32> to vector<16x32xf32>
    %57 = vector.shape_cast %56 : vector<16x32xf32> to vector<1x16x32xf32>
    %58 = vector.broadcast %54 : vector<16x1x32xf32> to vector<16x16x32xf32>
    %59 = vector.broadcast %57 : vector<1x16x32xf32> to vector<16x16x32xf32>
    %60 = arith.mulf %58, %59 : vector<16x16x32xf32>
    %61 = arith.addf %51, %60 : vector<16x16x32xf32>
    %62 = vector.extract_strided_slice %34 {offsets = [2, 0, 0], sizes = [1, 16, 32], strides = [1, 1, 1]} : vector<4x16x32xf32> to vector<1x16x32xf32>
    %63 = vector.shape_cast %62 : vector<1x16x32xf32> to vector<16x32xf32>
    %64 = vector.shape_cast %63 : vector<16x32xf32> to vector<16x1x32xf32>
    %65 = vector.extract_strided_slice %40 {offsets = [2, 0, 0], sizes = [1, 16, 32], strides = [1, 1, 1]} : vector<4x16x32xf32> to vector<1x16x32xf32>
    %66 = vector.shape_cast %65 : vector<1x16x32xf32> to vector<16x32xf32>
    %67 = vector.shape_cast %66 : vector<16x32xf32> to vector<1x16x32xf32>
    %68 = vector.broadcast %64 : vector<16x1x32xf32> to vector<16x16x32xf32>
    %69 = vector.broadcast %67 : vector<1x16x32xf32> to vector<16x16x32xf32>
    %70 = arith.mulf %68, %69 : vector<16x16x32xf32>
    %71 = arith.addf %61, %70 : vector<16x16x32xf32>
    %72 = vector.extract_strided_slice %34 {offsets = [3, 0, 0], sizes = [1, 16, 32], strides = [1, 1, 1]} : vector<4x16x32xf32> to vector<1x16x32xf32>
    %73 = vector.shape_cast %72 : vector<1x16x32xf32> to vector<16x32xf32>
    %74 = vector.shape_cast %73 : vector<16x32xf32> to vector<16x1x32xf32>
    %75 = vector.extract_strided_slice %40 {offsets = [3, 0, 0], sizes = [1, 16, 32], strides = [1, 1, 1]} : vector<4x16x32xf32> to vector<1x16x32xf32>
    %76 = vector.shape_cast %75 : vector<1x16x32xf32> to vector<16x32xf32>
    %77 = vector.shape_cast %76 : vector<16x32xf32> to vector<1x16x32xf32>
    %78 = vector.broadcast %74 : vector<16x1x32xf32> to vector<16x16x32xf32>
    %79 = vector.broadcast %77 : vector<1x16x32xf32> to vector<16x16x32xf32>
    %80 = arith.mulf %78, %79 : vector<16x16x32xf32>
    %81 = arith.addf %71, %80 : vector<16x16x32xf32>
    %cst_22 = arith.constant 2.500000e-01 : f32
    %82 = vector.broadcast %cst_22 : f32 to vector<16x16x32xf32>
    %83 = arith.mulf %81, %82 : vector<16x16x32xf32>
    %84 = vector.shape_cast %83 : vector<16x16x32xf32> to vector<256x32xf32>
    %c0_23 = arith.constant 0 : index
    %c0_24 = arith.constant 0 : index
    %85 = vector.load %arg8[%c0_23, %c0_24] : memref<32x32xf32, #tpu.memory_space<vmem>>, vector<32x32xf32>
    %cst_25 = arith.constant dense<0.000000e+00> : vector<256x32xf32>
    %86 = tpu.matmul %84, %85, %cst_25 {dimension_numbers = #tpu.dot_dimension_numbers<[1], [0], [0], [1], [0, 0, 1, 1], [], []>} : vector<256x32xf32>, vector<32x32xf32>, vector<256x32xf32> -> vector<256x32xf32>
    %c0_26 = arith.constant 0 : index
    %c0_27 = arith.constant 0 : index
    %87 = vector.load %arg9[%c0_26, %c0_27] : memref<1x32xf32, #tpu.memory_space<vmem>>, vector<1x32xf32>
    %88 = vector.broadcast %87 : vector<1x32xf32> to vector<256x32xf32>
    %89 = arith.addf %86, %88 : vector<256x32xf32>
    %90 = vector.shape_cast %89 : vector<256x32xf32> to vector<16x16x32xf32>
    %c0_28 = arith.constant 0 : index
    %c0_29 = arith.constant 0 : index
    %c0_30 = arith.constant 0 : index
    %c0_31 = arith.constant 0 : index
    %91 = vector.load %arg10[%c0_28, %c0_29, %c0_30, %c0_31] : memref<1x16x16x32xf32, #tpu.memory_space<vmem>>, vector<1x16x16x32xf32>
    %92 = vector.shape_cast %91 : vector<1x16x16x32xf32> to vector<16x16x32xf32>
    %93 = vector.shape_cast %90 : vector<16x16x32xf32> to vector<1x16x16x32xf32>
    tpu.vector_store %arg10[%c0_28, %c0_29, %c0_30, %c0_31], %93 {strides = array<i32>} : memref<1x16x16x32xf32, #tpu.memory_space<vmem>>, vector<1x16x16x32xf32>,
    return
  }
  func.func @transform_0(%arg0: i32) -> (i32, i32, i32, i32) {
    %c0_i32 = arith.constant 0 : i32
    %c0_i32_0 = arith.constant 0 : i32
    %c0_i32_1 = arith.constant 0 : i32
    %c0_i32_2 = arith.constant 0 : i32
    return %arg0, %c0_i32, %c0_i32_0, %c0_i32_1 : i32, i32, i32, i32
  }
  func.func @transform_1(%arg0: i32) -> (i32, i32) {
    %c0_i32 = arith.constant 0 : i32
    %c0_i32_0 = arith.constant 0 : i32
    %c0_i32_1 = arith.constant 0 : i32
    return %c0_i32, %c0_i32_0 : i32, i32
  }
  func.func @transform_2(%arg0: i32) -> (i32, i32) {
    %c0_i32 = arith.constant 0 : i32
    %c0_i32_0 = arith.constant 0 : i32
    %c0_i32_1 = arith.constant 0 : i32
    return %c0_i32, %c0_i32_0 : i32, i32
  }
  func.func @transform_3(%arg0: i32) -> (i32, i32) {
    %c0_i32 = arith.constant 0 : i32
    %c0_i32_0 = arith.constant 0 : i32
    %c0_i32_1 = arith.constant 0 : i32
    return %c0_i32, %c0_i32_0 : i32, i32
  }
  func.func @transform_4(%arg0: i32) -> (i32, i32) {
    %c0_i32 = arith.constant 0 : i32
    %c0_i32_0 = arith.constant 0 : i32
    %c0_i32_1 = arith.constant 0 : i32
    return %c0_i32, %c0_i32_0 : i32, i32
  }
  func.func @transform_5(%arg0: i32) -> (i32, i32) {
    %c0_i32 = arith.constant 0 : i32
    %c0_i32_0 = arith.constant 0 : i32
    %c0_i32_1 = arith.constant 0 : i32
    return %c0_i32, %c0_i32_0 : i32, i32
  }
  func.func @transform_6(%arg0: i32) -> (i32, i32) {
    %c0_i32 = arith.constant 0 : i32
    %c0_i32_0 = arith.constant 0 : i32
    %c0_i32_1 = arith.constant 0 : i32
    return %c0_i32, %c0_i32_0 : i32, i32
  }
  func.func @transform_7(%arg0: i32) -> (i32, i32) {
    %c0_i32 = arith.constant 0 : i32
    %c0_i32_0 = arith.constant 0 : i32
    %c0_i32_1 = arith.constant 0 : i32
    return %c0_i32, %c0_i32_0 : i32, i32
  }
  func.func @transform_8(%arg0: i32) -> (i32, i32) {
    %c0_i32 = arith.constant 0 : i32
    %c0_i32_0 = arith.constant 0 : i32
    %c0_i32_1 = arith.constant 0 : i32
    return %c0_i32, %c0_i32_0 : i32, i32
  }
  func.func @transform_9(%arg0: i32) -> (i32, i32, i32, i32) {
    %c0_i32 = arith.constant 0 : i32
    %c0_i32_0 = arith.constant 0 : i32
    %c0_i32_1 = arith.constant 0 : i32
    %c0_i32_2 = arith.constant 0 : i32
    return %arg0, %c0_i32, %c0_i32_0, %c0_i32_1 : i32, i32, i32, i32
  }
}

</mosaic_0001>

<llo_original>
// kernel: tpu_custom_call.1
$region0: #{tpu_custom_call.1}
  #allocation0 [shape = 'u32[]', space=smem, size = 0x4, offset = 0x4, fixed_abs, tag = 'smem constant byte address 0x4 - core index']
  #allocation1 [shape = 'u32[144,128]{1,0:T(1,128)}', space=vmem, size = 0x12000, scoped, tag = 'internal scratch']
  %s0 = inlined_call_operand.hbm [shape: f32[2,4,16,32], index: 0, kind: input, shape index: {}]
  %s1 = inlined_call_operand.vmem [shape: f32[1,32], index: 1, kind: input, shape index: {}]
  %s2 = inlined_call_operand.vmem [shape: f32[1,32], index: 2, kind: input, shape index: {}]
  %s3 = inlined_call_operand.hbm [shape: f32[32,32], index: 3, kind: input, shape index: {}]
  %s4 = inlined_call_operand.vmem [shape: f32[1,32], index: 4, kind: input, shape index: {}]
  %s5 = inlined_call_operand.hbm [shape: f32[32,32], index: 5, kind: input, shape index: {}]
  %s6 = inlined_call_operand.vmem [shape: f32[1,32], index: 6, kind: input, shape index: {}]
  %s7 = inlined_call_operand.hbm [shape: f32[32,32], index: 7, kind: input, shape index: {}]
  %s8 = inlined_call_operand.vmem [shape: f32[1,32], index: 8, kind: input, shape index: {}]
  %s9 = inlined_call_operand.hbm [shape: f32[2,16,16,32], index: 9, kind: output, shape index: {}]
  %s10 = sld [smem:[#allocation0]]
  $region85: #{tpu_custom_call.1} parent=0
    _
  %s12 = ssub.s32 1, %s10
  %s13 = scalar_select 0, %s12, %s10
  $region1: #{tpu_custom_call.1} parent=0
    #allocation2 [shape = 'u8[65536]{0}', space=vmem, size = 0x10000, scoped, tag = 'input window, operand 0']
    #allocation3 [shape = 's32[2]{0}', space=sflag, size = 0x8, scoped, tag = 'scoped memory for tpu_custom_call.1']
    #allocation4 [shape = 's32[2]{0}', space=sflag, size = 0x8, scoped, tag = 'scoped memory for tpu_custom_call.1']
    #allocation5 [shape = 'u8[16384]{0}', space=vmem, size = 0x4000, scoped, tag = 'input window, operand 3, single buffered']
    #allocation6 [shape = 's32[1]{0}', space=sflag, size = 0x4, scoped, tag = 'scoped memory for tpu_custom_call.1']
    #allocation7 [shape = 'u8[16384]{0}', space=vmem, size = 0x4000, scoped, tag = 'input window, operand 5, single buffered']
    #allocation8 [shape = 'u8[16384]{0}', space=vmem, size = 0x4000, scoped, tag = 'input window, operand 7, single buffered']
    #allocation9 [shape = 's32[1]{0}', space=sflag, size = 0x4, scoped, tag = 'scoped memory for tpu_custom_call.1']
    #allocation10 [shape = 'u8[262144]{0}', space=vmem, size = 0x40000, scoped, tag = 'output window, operand 0']
    %14 = vsyncpa [#allocation3], 0
    %s15 = scalar_lea.sflag [#allocation3], 1
    %16 = vsyncpa %s15, 0
    %17 = vsyncpa [#allocation6], 0
    %18 = vsyncpa [#allocation9], 0
    %19 = vsyncpa [#allocation4], 0
    %s20 = scalar_lea.sflag [#allocation4], 1
    %21 = vsyncpa %s20, 0
    loop: start=0, step=1, limit=4
    $region2: #{tpu_custom_call.1} parent=1 // loop_pre_header
      _
    $region3: #{tpu_custom_call.1} parent=1 // loop_header
      %s23 = sphi 0, %s27
      %p24 = scmp.ge.s32.totalorder %s23, 4
      %s33 = sphi 0, %s35
      %s36 = sphi 0, %s33
      %s37 = sphi 0, %s36
      %s53 = sphi 0, %s37
      %s57 = sphi 0, %s57
      %s59 = sphi 0, %s57
      %s60 = sphi 0, %s59
      %s74 = sphi 0, %s60
      %s78 = sphi 0, %s78
      %s80 = sphi 0, %s78
      %s81 = sphi 0, %s80
      %s95 = sphi 0, %s81
      %s99 = sphi 0, %s99
      %s101 = sphi 0, %s99
      %s102 = sphi 0, %s101
      %s116 = sphi 0, %s102
      %s120 = sphi 0, %s120
      %s122 = sphi 0, %s120
      %s123 = sphi 0, %s122
      %s137 = sphi 0, %s123
      %s141 = sphi 0, %s141
      %s143 = sphi 0, %s141
      %s144 = sphi 0, %s143
      %s158 = sphi 0, %s144
      %s162 = sphi 0, %s162
      %s164 = sphi 0, %s162
      %s165 = sphi 0, %s164
      %s179 = sphi 0, %s165
      %s183 = sphi 0, %s183
      %s185 = sphi 0, %s183
      %s186 = sphi 0, %s185
      %s200 = sphi 0, %s186
      %s204 = sphi 0, %s204
      %s206 = sphi 0, %s204
      %s207 = sphi 0, %s206
      %s221 = sphi 0, %s207
      %s227 = sphi 0, %s229
      %s230 = sphi 0, %s227
      %s231 = sphi 0, %s230
      %s247 = sphi 0, %s231
    $region4: #{tpu_custom_call.1} parent=1 // loop_header_branch
      %26 = sbr.rel (%p24) target = $region8
    $region5: #{tpu_custom_call.1} parent=1 // loop_body
      %s28 = ssub.s32 %s23, 1
      %s29 = ssub.s32 %s23, 2
      %s30 = sadd.s32 %s23, 1
      %s31 = ssub.s32 %s23, %s30
      %p32 = scmp.eq.s32.totalorder %s31, 0
      %s34 = sadd.s32 %s33, 1
      %s35 = scalar_select %p32, %s33, %s34
      %p38 = pneg %p32
      %p39 = scmp.eq.s32.totalorder %s23, 1
      %p40 = por %p38, %p39
      %p41 = scmp.ne.s32.totalorder %s33, %s36
      %p42 = scmp.eq.s32.totalorder %s23, 0
      %p43 = por %p41, %p42
      %p44 = scmp.ne.s32.totalorder %s33, %s36
      %p45 = scmp.eq.s32.totalorder %s28, 1
      %p46 = por %p44, %p45
      %p47 = scmp.ne.s32.totalorder %s36, %s37
      %p48 = scmp.eq.s32.totalorder %s28, 0
      %p49 = por %p47, %p48
      %p50 = scmp.ne.s32.totalorder %s36, %s37
      %p51 = scmp.eq.s32.totalorder %s29, 1
      %p52 = por %p50, %p51
      %p54 = scmp.ne.s32.totalorder %s37, %s53
      %p55 = scmp.eq.s32.totalorder %s29, 0
      %p56 = por %p54, %p55
      %s58 = sadd.s32 %s57, 1
      %p61 = scmp.eq.s32.totalorder %s23, 1
      %p62 = scmp.ne.s32.totalorder %s57, %s59
      %p63 = scmp.eq.s32.totalorder %s23, 0
      %p64 = por %p62, %p63
      %p65 = scmp.ne.s32.totalorder %s57, %s59
      %p66 = scmp.eq.s32.totalorder %s28, 1
      %p67 = por %p65, %p66
      %p68 = scmp.ne.s32.totalorder %s59, %s60
      %p69 = scmp.eq.s32.totalorder %s28, 0
      %p70 = por %p68, %p69
      %p71 = scmp.ne.s32.totalorder %s59, %s60
      %p72 = scmp.eq.s32.totalorder %s29, 1
      %p73 = por %p71, %p72
      %p75 = scmp.ne.s32.totalorder %s60, %s74
      %p76 = scmp.eq.s32.totalorder %s29, 0
      %p77 = por %p75, %p76
      %s79 = sadd.s32 %s78, 1
      %p82 = scmp.eq.s32.totalorder %s23, 1
      %p83 = scmp.ne.s32.totalorder %s78, %s80
      %p84 = scmp.eq.s32.totalorder %s23, 0
      %p85 = por %p83, %p84
      %p86 = scmp.ne.s32.totalorder %s78, %s80
      %p87 = scmp.eq.s32.totalorder %s28, 1
      %p88 = por %p86, %p87
      %p89 = scmp.ne.s32.totalorder %s80, %s81
      %p90 = scmp.eq.s32.totalorder %s28, 0
      %p91 = por %p89, %p90
      %p92 = scmp.ne.s32.totalorder %s80, %s81
      %p93 = scmp.eq.s32.totalorder %s29, 1
      %p94 = por %p92, %p93
      %p96 = scmp.ne.s32.totalorder %s81, %s95
      %p97 = scmp.eq.s32.totalorder %s29, 0
      %p98 = por %p96, %p97
      %s100 = sadd.s32 %s99, 1
      %p103 = scmp.eq.s32.totalorder %s23, 1
      %p104 = scmp.ne.s32.totalorder %s99, %s101
      %p105 = scmp.eq.s32.totalorder %s23, 0
      %p106 = por %p104, %p105
      %p107 = scmp.ne.s32.totalorder %s99, %s101
      %p108 = scmp.eq.s32.totalorder %s28, 1
      %p109 = por %p107, %p108
      %p110 = scmp.ne.s32.totalorder %s101, %s102
      %p111 = scmp.eq.s32.totalorder %s28, 0
      %p112 = por %p110, %p111
      %p113 = scmp.ne.s32.totalorder %s101, %s102
      %p114 = scmp.eq.s32.totalorder %s29, 1
      %p115 = por %p113, %p114
      %p117 = scmp.ne.s32.totalorder %s102, %s116
      %p118 = scmp.eq.s32.totalorder %s29, 0
      %p119 = por %p117, %p118
      %s121 = sadd.s32 %s120, 1
      %p124 = scmp.eq.s32.totalorder %s23, 1
      %p125 = scmp.ne.s32.totalorder %s120, %s122
      %p126 = scmp.eq.s32.totalorder %s23, 0
      %p127 = por %p125, %p126
      %p128 = scmp.ne.s32.totalorder %s120, %s122
      %p129 = scmp.eq.s32.totalorder %s28, 1
      %p130 = por %p128, %p129
      %p131 = scmp.ne.s32.totalorder %s122, %s123
      %p132 = scmp.eq.s32.totalorder %s28, 0
      %p133 = por %p131, %p132
      %p134 = scmp.ne.s32.totalorder %s122, %s123
      %p135 = scmp.eq.s32.totalorder %s29, 1
      %p136 = por %p134, %p135
      %p138 = scmp.ne.s32.totalorder %s123, %s137
      %p139 = scmp.eq.s32.totalorder %s29, 0
      %p140 = por %p138, %p139
      %s142 = sadd.s32 %s141, 1
      %p145 = scmp.eq.s32.totalorder %s23, 1
      %p146 = scmp.ne.s32.totalorder %s141, %s143
      %p147 = scmp.eq.s32.totalorder %s23, 0
      %p148 = por %p146, %p147
      %p149 = scmp.ne.s32.totalorder %s141, %s143
      %p150 = scmp.eq.s32.totalorder %s28, 1
      %p151 = por %p149, %p150
      %p152 = scmp.ne.s32.totalorder %s143, %s144
      %p153 = scmp.eq.s32.totalorder %s28, 0
      %p154 = por %p152, %p153
      %p155 = scmp.ne.s32.totalorder %s143, %s144
      %p156 = scmp.eq.s32.totalorder %s29, 1
      %p157 = por %p155, %p156
      %p159 = scmp.ne.s32.totalorder %s144, %s158
      %p160 = scmp.eq.s32.totalorder %s29, 0
      %p161 = por %p159, %p160
      %s163 = sadd.s32 %s162, 1
      %p166 = scmp.eq.s32.totalorder %s23, 1
      %p167 = scmp.ne.s32.totalorder %s162, %s164
      %p168 = scmp.eq.s32.totalorder %s23, 0
      %p169 = por %p167, %p168
      %p170 = scmp.ne.s32.totalorder %s162, %s164
      %p171 = scmp.eq.s32.totalorder %s28, 1
      %p172 = por %p170, %p171
      %p173 = scmp.ne.s32.totalorder %s164, %s165
      %p174 = scmp.eq.s32.totalorder %s28, 0
      %p175 = por %p173, %p174
      %p176 = scmp.ne.s32.totalorder %s164, %s165
      %p177 = scmp.eq.s32.totalorder %s29, 1
      %p178 = por %p176, %p177
      %p180 = scmp.ne.s32.totalorder %s165, %s179
      %p181 = scmp.eq.s32.totalorder %s29, 0
      %p182 = por %p180, %p181
      %s184 = sadd.s32 %s183, 1
      %p187 = scmp.eq.s32.totalorder %s23, 1
      %p188 = scmp.ne.s32.totalorder %s183, %s185
      %p189 = scmp.eq.s32.totalorder %s23, 0
      %p190 = por %p188, %p189
      %p191 = scmp.ne.s32.totalorder %s183, %s185
      %p192 = scmp.eq.s32.totalorder %s28, 1
      %p193 = por %p191, %p192
      %p194 = scmp.ne.s32.totalorder %s185, %s186
      %p195 = scmp.eq.s32.totalorder %s28, 0
      %p196 = por %p194, %p195
      %p197 = scmp.ne.s32.totalorder %s185, %s186
      %p198 = scmp.eq.s32.totalorder %s29, 1
      %p199 = por %p197, %p198
      %p201 = scmp.ne.s32.totalorder %s186, %s200
      %p202 = scmp.eq.s32.totalorder %s29, 0
      %p203 = por %p201, %p202
      %s205 = sadd.s32 %s204, 1
      %p208 = scmp.eq.s32.totalorder %s23, 1
      %p209 = scmp.ne.s32.totalorder %s204, %s206
      %p210 = scmp.eq.s32.totalorder %s23, 0
      %p211 = por %p209, %p210
      %p212 = scmp.ne.s32.totalorder %s204, %s206
      %p213 = scmp.eq.s32.totalorder %s28, 1
      %p214 = por %p212, %p213
      %p215 = scmp.ne.s32.totalorder %s206, %s207
      %p216 = scmp.eq.s32.totalorder %s28, 0
      %p217 = por %p215, %p216
      %p218 = scmp.ne.s32.totalorder %s206, %s207
      %p219 = scmp.eq.s32.totalorder %s29, 1
      %p220 = por %p218, %p219
      %p222 = scmp.ne.s32.totalorder %s207, %s221
      %p223 = scmp.eq.s32.totalorder %s29, 0
      %p224 = por %p222, %p223
      %s225 = ssub.s32 %s23, %s30
      %p226 = scmp.eq.s32.totalorder %s225, 0
      %s228 = sadd.s32 %s227, 1
      %s229 = scalar_select %p226, %s227, %s228
      %p232 = pneg %p226
      %p233 = scmp.eq.s32.totalorder %s23, 1
      %p234 = por %p232, %p233
      %p235 = scmp.ne.s32.totalorder %s227, %s230
      %p236 = scmp.eq.s32.totalorder %s23, 0
      %p237 = por %p235, %p236
      %p238 = scmp.ne.s32.totalorder %s227, %s230
      %p239 = scmp.eq.s32.totalorder %s28, 1
      %p240 = por %p238, %p239
      %p241 = scmp.ne.s32.totalorder %s230, %s231
      %p242 = scmp.eq.s32.totalorder %s28, 0
      %p243 = por %p241, %p242
      %p244 = scmp.ne.s32.totalorder %s230, %s231
      %p245 = scmp.eq.s32.totalorder %s29, 1
      %p246 = por %p244, %p245
      %p248 = scmp.ne.s32.totalorder %s231, %s247
      %p249 = scmp.eq.s32.totalorder %s29, 0
      %p250 = por %p248, %p249
      %p251 = scmp.le.s32.totalorder 1, %s23
      %p252 = scmp.lt.s32.totalorder %s23, 3
      %p253 = pnand %p251, %p252
      %p254 = pneg %p253
      // Predicated region
      $region9: #{tpu_custom_call.1} parent=5 // pred_check
        _
      $region10: #{tpu_custom_call.1} parent=5 // pred_check_branch
        %256 = sbr.rel (%p253) target = $region12
      $region11: #{tpu_custom_call.1} parent=5 // pred_region
        %s257 = ssub.s32 %s23, 1
        // Predicated region
        $region13: #{tpu_custom_call.1} parent=11 // pred_check
          %p258 = pneg %p70
        $region14: #{tpu_custom_call.1} parent=11 // pred_check_branch
          %260 = sbr.rel (%p258) target = $region16
        $region15: #{tpu_custom_call.1} parent=11 // pred_region
          _
        $region16: #{tpu_custom_call.1} parent=11 // pred_fallthru
          _
        // Predicated region
        $region17: #{tpu_custom_call.1} parent=11 // pred_check
          %p261 = pneg %p91
        $region18: #{tpu_custom_call.1} parent=11 // pred_check_branch
          %263 = sbr.rel (%p261) target = $region20
        $region19: #{tpu_custom_call.1} parent=11 // pred_region
          _
        $region20: #{tpu_custom_call.1} parent=11 // pred_fallthru
          _
        // Predicated region
        $region21: #{tpu_custom_call.1} parent=11 // pred_check
          %p264 = pneg %p112
        $region22: #{tpu_custom_call.1} parent=11 // pred_check_branch
          %266 = sbr.rel (%p264) target = $region24
        $region23: #{tpu_custom_call.1} parent=11 // pred_region
          %s268 = ssub.s32 512, 512
          %269 = vsyncadd [#allocation6], %s268
          %s270 = sshll.u32 [#allocation5], 4
          %s271 = int_to_ptr.vmem [resolvable:$true] %s270
          %276 = dma.hbm_to_vmem [thread:$0]  %s3, 512, %s271, [#allocation6], 128, 128, 8
        $region24: #{tpu_custom_call.1} parent=11 // pred_fallthru
          _
        // Predicated region
        $region25: #{tpu_custom_call.1} parent=11 // pred_check
          %p277 = pneg %p133
        $region26: #{tpu_custom_call.1} parent=11 // pred_check_branch
          %279 = sbr.rel (%p277) target = $region28
        $region27: #{tpu_custom_call.1} parent=11 // pred_region
          _
        $region28: #{tpu_custom_call.1} parent=11 // pred_fallthru
          _
        // Predicated region
        $region29: #{tpu_custom_call.1} parent=11 // pred_check
          %p280 = pneg %p154
        $region30: #{tpu_custom_call.1} parent=11 // pred_check_branch
          %282 = sbr.rel (%p280) target = $region32
        $region31: #{tpu_custom_call.1} parent=11 // pred_region
          %s284 = ssub.s32 512, 512
          %285 = vsyncadd [#allocation6], %s284
          %s286 = sshll.u32 [#allocation7], 4
          %s287 = int_to_ptr.vmem [resolvable:$true] %s286
          %292 = dma.hbm_to_vmem [thread:$0]  %s5, 512, %s287, [#allocation6], 128, 128, 8
        $region32: #{tpu_custom_call.1} parent=11 // pred_fallthru
          _
        // Predicated region
        $region33: #{tpu_custom_call.1} parent=11 // pred_check
          %p293 = pneg %p175
        $region34: #{tpu_custom_call.1} parent=11 // pred_check_branch
          %295 = sbr.rel (%p293) target = $region36
        $region35: #{tpu_custom_call.1} parent=11 // pred_region
          _
        $region36: #{tpu_custom_call.1} parent=11 // pred_fallthru
          _
        // Predicated region
        $region37: #{tpu_custom_call.1} parent=11 // pred_check
          %p296 = pneg %p196
        $region38: #{tpu_custom_call.1} parent=11 // pred_check_branch
          %298 = sbr.rel (%p296) target = $region40
        $region39: #{tpu_custom_call.1} parent=11 // pred_region
          %s300 = ssub.s32 512, 512
          %301 = vsyncadd [#allocation9], %s300
          %s302 = sshll.u32 [#allocation8], 4
          %s303 = int_to_ptr.vmem [resolvable:$true] %s302
          %308 = dma.hbm_to_vmem [thread:$0]  %s7, 512, %s303, [#allocation9], 128, 128, 8
        $region40: #{tpu_custom_call.1} parent=11 // pred_fallthru
          _
        // Predicated region
        $region41: #{tpu_custom_call.1} parent=11 // pred_check
          %p309 = pneg %p217
        $region42: #{tpu_custom_call.1} parent=11 // pred_check_branch
          %311 = sbr.rel (%p309) target = $region44
        $region43: #{tpu_custom_call.1} parent=11 // pred_region
          _
        $region44: #{tpu_custom_call.1} parent=11 // pred_fallthru
          _
      $region12: #{tpu_custom_call.1} parent=5 // pred_fallthru
        _
      %p312 = scmp.lt.s32.totalorder %s23, 2
      // Predicated region
      $region45: #{tpu_custom_call.1} parent=5 // pred_check
        %p313 = pneg %p312
      $region46: #{tpu_custom_call.1} parent=5 // pred_check_branch
        %315 = sbr.rel (%p313) target = $region48
      $region47: #{tpu_custom_call.1} parent=5 // pred_region
        // Predicated region
        $region49: #{tpu_custom_call.1} parent=47 // pred_check
          %p316 = pneg %p43
        $region50: #{tpu_custom_call.1} parent=47 // pred_check_branch
          %318 = sbr.rel (%p316) target = $region52
        $region51: #{tpu_custom_call.1} parent=47 // pred_region
          %s319 = sand.u32 %s33, 1
          %s320 = scalar_lea.sflag [#allocation3], %s319
          %s321 = sand.u32 %s33, 1
          %s322 = smul.addr %s321, 64
          %s323 = scalar_lea.vmem [#allocation2], %s322
          %s325 = ssub.s32 1024, 1024
          %326 = vsyncadd %s320, %s325
          %s327 = smul.addr %s23, 8
          %s328 = smul.addr %s327, 128
          %s329 = scalar_lea.hbm %s0, %s328
          %s330 = sshll.u32 %s323, 4
          %s331 = int_to_ptr.vmem [resolvable:$true] %s330
          %336 = dma.hbm_to_vmem [thread:$0]  %s329, 1024, %s331, %s320, 128, 128, 8
        $region52: #{tpu_custom_call.1} parent=47 // pred_fallthru
          _
      $region48: #{tpu_custom_call.1} parent=5 // pred_fallthru
        _
      %p337 = scmp.le.s32.totalorder 1, %s23
      %p338 = scmp.lt.s32.totalorder %s23, 3
      %p339 = pnand %p337, %p338
      %p340 = pneg %p339
      // Predicated region
      $region53: #{tpu_custom_call.1} parent=5 // pred_check
        _
      $region54: #{tpu_custom_call.1} parent=5 // pred_check_branch
        %342 = sbr.rel (%p339) target = $region56
      $region55: #{tpu_custom_call.1} parent=5 // pred_region
        %s343 = ssub.s32 %s23, 1
        %s344 = sand.u32 %s36, 1
        %s345 = scalar_lea.sflag [#allocation3], %s344
        %s346 = sand.u32 %s36, 1
        %s347 = smul.addr %s346, 64
        %s348 = scalar_lea.vmem [#allocation2], %s347
        // Predicated region
        $region57: #{tpu_custom_call.1} parent=55 // pred_check
          %p349 = pneg %p49
        $region58: #{tpu_custom_call.1} parent=55 // pred_check_branch
          %351 = sbr.rel (%p349) target = $region60
        $region59: #{tpu_custom_call.1} parent=55 // pred_region
          %352 = dma.done %s345, 1024
        $region60: #{tpu_custom_call.1} parent=55 // pred_fallthru
          _
        // Predicated region
        $region61: #{tpu_custom_call.1} parent=55 // pred_check
          %p353 = pneg %p112
        $region62: #{tpu_custom_call.1} parent=55 // pred_check_branch
          %355 = sbr.rel (%p353) target = $region64
        $region63: #{tpu_custom_call.1} parent=55 // pred_region
          %356 = dma.done [#allocation6], 512
        $region64: #{tpu_custom_call.1} parent=55 // pred_fallthru
          _
        // Predicated region
        $region65: #{tpu_custom_call.1} parent=55 // pred_check
          %p357 = pneg %p154
        $region66: #{tpu_custom_call.1} parent=55 // pred_check_branch
          %359 = sbr.rel (%p357) target = $region68
        $region67: #{tpu_custom_call.1} parent=55 // pred_region
          %360 = dma.done [#allocation6], 512
        $region68: #{tpu_custom_call.1} parent=55 // pred_fallthru
          _
        // Predicated region
        $region69: #{tpu_custom_call.1} parent=55 // pred_check
          %p361 = pneg %p196
        $region70: #{tpu_custom_call.1} parent=55 // pred_check_branch
          %363 = sbr.rel (%p361) target = $region72
        $region71: #{tpu_custom_call.1} parent=55 // pred_region
          %364 = dma.done [#allocation9], 512
        $region72: #{tpu_custom_call.1} parent=55 // pred_fallthru
          _
        %s365 = sand.u32 %s36, 1
        %s366 = scalar_lea.sflag [#allocation3], %s365
        %s367 = sand.u32 %s36, 1
        %s368 = smul.addr %s367, 64
        %s369 = scalar_lea.vmem [#allocation2], %s368
        %p370 = pneg %p49
        %p371 = pneg %p46
        %p372 = pneg %p70
        %p373 = pneg %p67
        %p374 = pneg %p91
        %p375 = pneg %p88
        %p376 = pneg %p112
        %p377 = pneg %p109
        %p378 = pneg %p133
        %p379 = pneg %p130
        %p380 = pneg %p154
        %p381 = pneg %p151
        %p382 = pneg %p175
        %p383 = pneg %p172
        %p384 = pneg %p196
        %p385 = pneg %p193
        %p386 = pneg %p217
        %p387 = pneg %p214
        %p388 = pneg %p243
        %p389 = pneg %p240
        %s390 = sand.u32 %s230, 1
        %s391 = scalar_lea.sflag [#allocation4], %s390
        %s392 = sand.u32 %s230, 1
        %s393 = smul.addr %s392, 256
        %s394 = scalar_lea.vmem [#allocation10], %s393
        %v395 = vld [vmem:[%s348] sm:$0xff]
        %v396 = vld [vmem:[%s348 + $0x8] sm:$0xff]
        %v397 = vld [vmem:[%s348 + $0x10] sm:$0xff]
        %v398 = vld [vmem:[%s348 + $0x18] sm:$0xff]
        %v399 = vld [vmem:[%s348 + $0x20] sm:$0xff]
        %v400 = vld [vmem:[%s348 + $0x28] sm:$0xff]
        %v401 = vld [vmem:[%s348 + $0x30] sm:$0xff]
        %v402 = vld [vmem:[%s348 + $0x38] sm:$0xff]
        %vm403 = vcmask 261120
        %v404 = vsel %vm403, %v395, 0.0
        %405 = vadd.xlane.f32.xlu0 %v404
        %v406 = vpop.xlane.xlu0 %405
        %v407 = vsel %vm403, %v396, 0.0
        %408 = vadd.xlane.f32.xlu0 %v407
        %v409 = vpop.xlane.xlu0 %408
        %v410 = vsel %vm403, %v397, 0.0
        %411 = vadd.xlane.f32.xlu0 %v410
        %v412 = vpop.xlane.xlu0 %411
        %v413 = vsel %vm403, %v398, 0.0
        %414 = vadd.xlane.f32.xlu0 %v413
        %v415 = vpop.xlane.xlu0 %414
        %v416 = vsel %vm403, %v399, 0.0
        %417 = vadd.xlane.f32.xlu0 %v416
        %v418 = vpop.xlane.xlu0 %417
        %v419 = vsel %vm403, %v400, 0.0
        %420 = vadd.xlane.f32.xlu0 %v419
        %v421 = vpop.xlane.xlu0 %420
        %v422 = vsel %vm403, %v401, 0.0
        %423 = vadd.xlane.f32.xlu0 %v422
        %v424 = vpop.xlane.xlu0 %423
        %v425 = vsel %vm403, %v402, 0.0
        %426 = vadd.xlane.f32.xlu0 %v425
        %v427 = vpop.xlane.xlu0 %426
        %v428 = vrcp.pop 32.0
        %v429 = vmul.f32 %v406, %v428
        %v430 = vmul.f32 %v409, %v428
        %v431 = vmul.f32 %v412, %v428
        %v432 = vmul.f32 %v415, %v428
        %v433 = vmul.f32 %v418, %v428
        %v434 = vmul.f32 %v421, %v428
        %v435 = vmul.f32 %v424, %v428
        %v436 = vmul.f32 %v427, %v428
        %v437 = vsub.f32 %v395, %v429
        %v438 = vsub.f32 %v396, %v430
        %v439 = vsub.f32 %v397, %v431
        %v440 = vsub.f32 %v398, %v432
        %v441 = vsub.f32 %v399, %v433
        %v442 = vsub.f32 %v400, %v434
        %v443 = vsub.f32 %v401, %v435
        %v444 = vsub.f32 %v402, %v436
        %v445 = vmul.f32 %v437, %v437
        %v446 = vmul.f32 %v438, %v438
        %v447 = vmul.f32 %v439, %v439
        %v448 = vmul.f32 %v440, %v440
        %v449 = vmul.f32 %v441, %v441
        %v450 = vmul.f32 %v442, %v442
        %v451 = vmul.f32 %v443, %v443
        %v452 = vmul.f32 %v444, %v444
        %v453 = vsel %vm403, %v445, 0.0
        %454 = vadd.xlane.f32.xlu0 %v453
        %v455 = vpop.xlane.xlu0 %454
        %v456 = vsel %vm403, %v446, 0.0
        %457 = vadd.xlane.f32.xlu0 %v456
        %v458 = vpop.xlane.xlu0 %457
        %v459 = vsel %vm403, %v447, 0.0
        %460 = vadd.xlane.f32.xlu0 %v459
        %v461 = vpop.xlane.xlu0 %460
        %v462 = vsel %vm403, %v448, 0.0
        %463 = vadd.xlane.f32.xlu0 %v462
        %v464 = vpop.xlane.xlu0 %463
        %v465 = vsel %vm403, %v449, 0.0
        %466 = vadd.xlane.f32.xlu0 %v465
        %v467 = vpop.xlane.xlu0 %466
        %v468 = vsel %vm403, %v450, 0.0
        %469 = vadd.xlane.f32.xlu0 %v468
        %v470 = vpop.xlane.xlu0 %469
        %v471 = vsel %vm403, %v451, 0.0
        %472 = vadd.xlane.f32.xlu0 %v471
        %v473 = vpop.xlane.xlu0 %472
        %v474 = vsel %vm403, %v452, 0.0
        %475 = vadd.xlane.f32.xlu0 %v474
        %v476 = vpop.xlane.xlu0 %475
        %v477 = vmul.f32 %v455, %v428
        %v478 = vmul.f32 %v458, %v428
        %v479 = vmul.f32 %v461, %v428
        %v480 = vmul.f32 %v464, %v428
        %v481 = vmul.f32 %v467, %v428
        %v482 = vmul.f32 %v470, %v428
        %v483 = vmul.f32 %v473, %v428
        %v484 = vmul.f32 %v476, %v428
        %v485 = vadd.f32 %v477, 1e-05
        %v486 = vadd.f32 %v478, 1e-05
        %v487 = vadd.f32 %v479, 1e-05
        %v488 = vadd.f32 %v480, 1e-05
        %v489 = vadd.f32 %v481, 1e-05
        %v490 = vadd.f32 %v482, 1e-05
        %v491 = vadd.f32 %v483, 1e-05
        %v492 = vadd.f32 %v484, 1e-05
        %v493 = vrsqrt.pop %v485
        %v494 = vrsqrt.pop %v486
        %v495 = vrsqrt.pop %v487
        %v496 = vrsqrt.pop %v488
        %v497 = vrsqrt.pop %v489
        %v498 = vrsqrt.pop %v490
        %v499 = vrsqrt.pop %v491
        %v500 = vrsqrt.pop %v492
        %v501 = vmul.f32 %v437, %v493
        %v502 = vmul.f32 %v438, %v494
        %v503 = vmul.f32 %v439, %v495
        %v504 = vmul.f32 %v440, %v496
        %v505 = vmul.f32 %v441, %v497
        %v506 = vmul.f32 %v442, %v498
        %v507 = vmul.f32 %v443, %v499
        %v508 = vmul.f32 %v444, %v500
        %v509 = vld [vmem:[%s1] sm:$0x1]
        %v511 = vlaneseq
        %v512 = vshrl.u32 %v511, 7
        %v513 = vsub.s32 0, %v512
        %v514 = vrot.slane %v509, %v513
        %v516 = vmul.f32 %v501, %v514
        %v517 = vmul.f32 %v502, %v514
        %v518 = vmul.f32 %v503, %v514
        %v519 = vmul.f32 %v504, %v514
        %v520 = vmul.f32 %v505, %v514
        %v521 = vmul.f32 %v506, %v514
        %v522 = vmul.f32 %v507, %v514
        %v523 = vmul.f32 %v508, %v514
        %v524 = vld [vmem:[%s2] sm:$0x1]
        %v526 = vlaneseq
        %v527 = vshrl.u32 %v526, 7
        %v528 = vsub.s32 0, %v527
        %v529 = vrot.slane %v524, %v528
        %v531 = vadd.f32 %v516, %v529
        %v532 = vadd.f32 %v517, %v529
        %v533 = vadd.f32 %v518, %v529
        %v534 = vadd.f32 %v519, %v529
        %v535 = vadd.f32 %v520, %v529
        %v536 = vadd.f32 %v521, %v529
        %v537 = vadd.f32 %v522, %v529
        %v538 = vadd.f32 %v523, %v529
        %v539 = vld [vmem:[#allocation5] sm:$0xff]
        %v540 = vld [vmem:[#allocation5 + $0x8] sm:$0xff]
        %v541 = vld [vmem:[#allocation5 + $0x10] sm:$0xff]
        %v542 = vld [vmem:[#allocation5 + $0x18] sm:$0xff]
        %v543 = vld [vmem:[%s4] sm:$0x1]
        %v545 = vlaneseq
        %v546 = vshrl.u32 %v545, 7
        %v547 = vsub.s32 0, %v546
        %v548 = vrot.slane %v543, %v547
        %v551 = vsel %vm403, %v531, 0
        %v554 = vsel %vm403, %v532, 0
        %v557 = vsel %vm403, %v533, 0
        %v560 = vsel %vm403, %v534, 0
        %v563 = vsel %vm403, %v535, 0
        %v566 = vsel %vm403, %v536, 0
        %v569 = vsel %vm403, %v537, 0
        %v572 = vsel %vm403, %v538, 0
        %574 = vmatprep.subr.mxu0 0.0
        %575 = vmatpush1.msra.mxu0 %v539
        %576 = vmatprep.subr.mxu0 0.0
        %577 = vmatpush1.msra.mxu0 %v540
        %578 = vmatprep.subr.mxu0 0.0
        %579 = vmatpush1.msra.mxu0 %v541
        %580 = vmatprep.subr.mxu0 0.0
        %581 = vmatpush1.msra.mxu0 %v542
        %582 = vmatprep.subr.mxu0 0.0
        %583 = vmatpush1.msra.mxu0 0.0
        %584 = vmatprep.subr.mxu0 0.0
        %585 = vmatpush1.msra.mxu0 0.0
        %586 = vmatprep.subr.mxu0 0.0
        %587 = vmatpush1.msra.mxu0 0.0
        %588 = vmatprep.subr.mxu0 0.0
        %589 = vmatpush1.msra.mxu0 0.0
        %590 = vmatprep.subr.mxu0 0.0
        %591 = vmatpush1.msra.mxu0 0.0
        %592 = vmatprep.subr.mxu0 0.0
        %593 = vmatpush1.msra.mxu0 0.0
        %594 = vmatprep.subr.mxu0 0.0
        %595 = vmatpush1.msra.mxu0 0.0
        %596 = vmatprep.subr.mxu0 0.0
        %597 = vmatpush1.msra.mxu0 0.0
        %598 = vmatprep.subr.mxu0 0.0
        %599 = vmatpush1.msra.mxu0 0.0
        %600 = vmatprep.subr.mxu0 0.0
        %601 = vmatpush1.msra.mxu0 0.0
        %602 = vmatprep.subr.mxu0 0.0
        %603 = vmatpush1.msra.mxu0 0.0
        %604 = vmatprep.subr.mxu0 0.0
        %605 = vmatpush1.msra.mxu0 0.0
        %606 = vmatprep.subr.mxu0 0.0
        %607 = vmatpush1.msra.mxu0 0.0
        %608 = vmatprep.subr.mxu0 0.0
        %609 = vmatpush1.msra.mxu0 0.0
        %610 = vmatprep.subr.mxu0 0.0
        %611 = vmatpush1.msra.mxu0 0.0
        %612 = vmatprep.subr.mxu0 0.0
        %613 = vmatpush1.msra.mxu0 0.0
        %614 = vmatprep.subr.mxu0 0.0
        %615 = vmatpush1.msra.mxu0 0.0
        %616 = vmatprep.subr.mxu0 0.0
        %617 = vmatpush1.msra.mxu0 0.0
        %618 = vmatprep.subr.mxu0 0.0
        %619 = vmatpush1.msra.mxu0 0.0
        %620 = vmatprep.subr.mxu0 0.0
        %621 = vmatpush1.msra.mxu0 0.0
        %622 = vmatprep.subr.mxu0 0.0
        %623 = vmatpush1.msra.mxu0 0.0
        %624 = vmatprep.subr.mxu0 0.0
        %625 = vmatpush1.msra.mxu0 0.0
        %626 = vmatprep.subr.mxu0 0.0
        %627 = vmatpush1.msra.mxu0 0.0
        %628 = vmatprep.subr.mxu0 0.0
        %629 = vmatpush1.msra.mxu0 0.0
        %630 = vmatprep.subr.mxu0 0.0
        %631 = vmatpush1.msra.mxu0 0.0
        %632 = vmatprep.subr.mxu0 0.0
        %633 = vmatpush1.msra.mxu0 0.0
        %634 = vmatprep.subr.mxu0 0.0
        %635 = vmatpush1.msra.mxu0 0.0
        %636 = vmatprep.subr.mxu0 0.0
        %637 = vmatpush1.msra.mxu0 0.0
        %638 = vmatprep.mubr.f32.mxu0 0.0
        %639 = vmatmul.mubr.f32.gmra.mrb[0].mxu0 %v551
        %v640 = vpop.f32.mrb[0].mxu0
        %v641 = vadd.f32 %v548, %v640
        %v642 = vpop.f32.mrb[0].mxu0
        %643 = vmatprep.mubr.f32.mxu0 0.0
        %644 = vmatmul.mubr.f32.gmra.mrb[0].mxu0 %v554
        %v645 = vpop.f32.mrb[0].mxu0
        %v646 = vadd.f32 %v548, %v645
        %v647 = vpop.f32.mrb[0].mxu0
        %648 = vmatprep.mubr.f32.mxu0 0.0
        %649 = vmatmul.mubr.f32.gmra.mrb[0].mxu0 %v557
        %v650 = vpop.f32.mrb[0].mxu0
        %v651 = vadd.f32 %v548, %v650
        %v652 = vpop.f32.mrb[0].mxu0
        %653 = vmatprep.mubr.f32.mxu0 0.0
        %654 = vmatmul.mubr.f32.gmra.mrb[0].mxu0 %v560
        %v655 = vpop.f32.mrb[0].mxu0
        %v656 = vadd.f32 %v548, %v655
        %v657 = vpop.f32.mrb[0].mxu0
        %658 = vmatprep.mubr.f32.mxu0 0.0
        %659 = vmatmul.mubr.f32.gmra.mrb[0].mxu0 %v563
        %v660 = vpop.f32.mrb[0].mxu0
        %v661 = vadd.f32 %v548, %v660
        %v662 = vpop.f32.mrb[0].mxu0
        %663 = vmatprep.mubr.f32.mxu0 0.0
        %664 = vmatmul.mubr.f32.gmra.mrb[0].mxu0 %v566
        %v665 = vpop.f32.mrb[0].mxu0
        %v666 = vadd.f32 %v548, %v665
        %v667 = vpop.f32.mrb[0].mxu0
        %668 = vmatprep.mubr.f32.mxu0 0.0
        %669 = vmatmul.mubr.f32.gmra.mrb[0].mxu0 %v569
        %v670 = vpop.f32.mrb[0].mxu0
        %v671 = vadd.f32 %v548, %v670
        %v672 = vpop.f32.mrb[0].mxu0
        %673 = vmatprep.mubr.f32.mxu0 0.0
        %674 = vmatmul.mubr.f32.gmra.mrb[0].mxu0 %v572
        %v675 = vpop.f32.mrb[0].mxu0
        %v676 = vadd.f32 %v548, %v675
        %v677 = vpop.f32.mrb[0].mxu0
        %678 = vdwg.mxu0
        %v679 = vld [vmem:[#allocation7] sm:$0xff]
        %v680 = vld [vmem:[#allocation7 + $0x8] sm:$0xff]
        %v681 = vld [vmem:[#allocation7 + $0x10] sm:$0xff]
        %v682 = vld [vmem:[#allocation7 + $0x18] sm:$0xff]
        %v683 = vld [vmem:[%s6] sm:$0x1]
        %v685 = vlaneseq
        %v686 = vshrl.u32 %v685, 7
        %v687 = vsub.s32 0, %v686
        %v688 = vrot.slane %v683, %v687
        %690 = vmatprep.subr.mxu0 0.0
        %691 = vmatpush1.msra.mxu0 %v679
        %692 = vmatprep.subr.mxu0 0.0
        %693 = vmatpush1.msra.mxu0 %v680
        %694 = vmatprep.subr.mxu0 0.0
        %695 = vmatpush1.msra.mxu0 %v681
        %696 = vmatprep.subr.mxu0 0.0
        %697 = vmatpush1.msra.mxu0 %v682
        %698 = vmatprep.subr.mxu0 0.0
        %699 = vmatpush1.msra.mxu0 0.0
        %700 = vmatprep.subr.mxu0 0.0
        %701 = vmatpush1.msra.mxu0 0.0
        %702 = vmatprep.subr.mxu0 0.0
        %703 = vmatpush1.msra.mxu0 0.0
        %704 = vmatprep.subr.mxu0 0.0
        %705 = vmatpush1.msra.mxu0 0.0
        %706 = vmatprep.subr.mxu0 0.0
        %707 = vmatpush1.msra.mxu0 0.0
        %708 = vmatprep.subr.mxu0 0.0
        %709 = vmatpush1.msra.mxu0 0.0
        %710 = vmatprep.subr.mxu0 0.0
        %711 = vmatpush1.msra.mxu0 0.0
        %712 = vmatprep.subr.mxu0 0.0
        %713 = vmatpush1.msra.mxu0 0.0
        %714 = vmatprep.subr.mxu0 0.0
        %715 = vmatpush1.msra.mxu0 0.0
        %716 = vmatprep.subr.mxu0 0.0
        %717 = vmatpush1.msra.mxu0 0.0
        %718 = vmatprep.subr.mxu0 0.0
        %719 = vmatpush1.msra.mxu0 0.0
        %720 = vmatprep.subr.mxu0 0.0
        %721 = vmatpush1.msra.mxu0 0.0
        %722 = vmatprep.subr.mxu0 0.0
        %723 = vmatpush1.msra.mxu0 0.0
        %724 = vmatprep.subr.mxu0 0.0
        %725 = vmatpush1.msra.mxu0 0.0
        %726 = vmatprep.subr.mxu0 0.0
        %727 = vmatpush1.msra.mxu0 0.0
        %728 = vmatprep.subr.mxu0 0.0
        %729 = vmatpush1.msra.mxu0 0.0
        %730 = vmatprep.subr.mxu0 0.0
        %731 = vmatpush1.msra.mxu0 0.0
        %732 = vmatprep.subr.mxu0 0.0
        %733 = vmatpush1.msra.mxu0 0.0
        %734 = vmatprep.subr.mxu0 0.0
        %735 = vmatpush1.msra.mxu0 0.0
        %736 = vmatprep.subr.mxu0 0.0
        %737 = vmatpush1.msra.mxu0 0.0
        %738 = vmatprep.subr.mxu0 0.0
        %739 = vmatpush1.msra.mxu0 0.0
        %740 = vmatprep.subr.mxu0 0.0
        %741 = vmatpush1.msra.mxu0 0.0
        %742 = vmatprep.subr.mxu0 0.0
        %743 = vmatpush1.msra.mxu0 0.0
        %744 = vmatprep.subr.mxu0 0.0
        %745 = vmatpush1.msra.mxu0 0.0
        %746 = vmatprep.subr.mxu0 0.0
        %747 = vmatpush1.msra.mxu0 0.0
        %748 = vmatprep.subr.mxu0 0.0
        %749 = vmatpush1.msra.mxu0 0.0
        %750 = vmatprep.subr.mxu0 0.0
        %751 = vmatpush1.msra.mxu0 0.0
        %752 = vmatprep.subr.mxu0 0.0
        %753 = vmatpush1.msra.mxu0 0.0
        %754 = vmatprep.mubr.f32.mxu0 0.0
        %755 = vmatmul.mubr.f32.gmra.mrb[0].mxu0 %v551
        %v756 = vpop.f32.mrb[0].mxu0
        %v757 = vadd.f32 %v688, %v756
        %v758 = vpop.f32.mrb[0].mxu0
        %759 = vmatprep.mubr.f32.mxu0 0.0
        %760 = vmatmul.mubr.f32.gmra.mrb[0].mxu0 %v554
        %v761 = vpop.f32.mrb[0].mxu0
        %v762 = vadd.f32 %v688, %v761
        %v763 = vpop.f32.mrb[0].mxu0
        %764 = vmatprep.mubr.f32.mxu0 0.0
        %765 = vmatmul.mubr.f32.gmra.mrb[0].mxu0 %v557
        %v766 = vpop.f32.mrb[0].mxu0
        %v767 = vadd.f32 %v688, %v766
        %v768 = vpop.f32.mrb[0].mxu0
        %769 = vmatprep.mubr.f32.mxu0 0.0
        %770 = vmatmul.mubr.f32.gmra.mrb[0].mxu0 %v560
        %v771 = vpop.f32.mrb[0].mxu0
        %v772 = vadd.f32 %v688, %v771
        %v773 = vpop.f32.mrb[0].mxu0
        %774 = vmatprep.mubr.f32.mxu0 0.0
        %775 = vmatmul.mubr.f32.gmra.mrb[0].mxu0 %v563
        %v776 = vpop.f32.mrb[0].mxu0
        %v777 = vadd.f32 %v688, %v776
        %v778 = vpop.f32.mrb[0].mxu0
        %779 = vmatprep.mubr.f32.mxu0 0.0
        %780 = vmatmul.mubr.f32.gmra.mrb[0].mxu0 %v566
        %v781 = vpop.f32.mrb[0].mxu0
        %v782 = vadd.f32 %v688, %v781
        %v783 = vpop.f32.mrb[0].mxu0
        %784 = vmatprep.mubr.f32.mxu0 0.0
        %785 = vmatmul.mubr.f32.gmra.mrb[0].mxu0 %v569
        %v786 = vpop.f32.mrb[0].mxu0
        %v787 = vadd.f32 %v688, %v786
        %v788 = vpop.f32.mrb[0].mxu0
        %789 = vmatprep.mubr.f32.mxu0 0.0
        %790 = vmatmul.mubr.f32.gmra.mrb[0].mxu0 %v572
        %v791 = vpop.f32.mrb[0].mxu0
        %v792 = vadd.f32 %v688, %v791
        %v793 = vpop.f32.mrb[0].mxu0
        %794 = vdwg.mxu0
        %v797 = vcombine.high %v641, %v641
        %v799 = vunpack.c.l.s4 1966171168
        %v800 = vunpack.c.0.s8 %v799
        %v801 = vlaneseq
        %v802 = vshrl.u32 %v801, 7
        %v803 = vsub.s32 %v800, %v802
        %v804 = vrot.slane %v641, %v803
        %v806 = vunpack.c.l.s4 1966171168
        %v807 = vunpack.c.0.s8 %v806
        %v808 = vlaneseq
        %v809 = vshrl.u32 %v808, 7
        %v810 = vsub.s32 %v807, %v809
        %v811 = vrot.slane %v797, %v810
        %v812 = vcombine.high %v804, %v804
        %v813 = vcombine.high %v811, %v811
        %v815 = vunpack.c.l.s4 1966171168
        %v816 = vunpack.c.0.s8 %v815
        %v817 = vlaneseq
        %v818 = vshrl.u32 %v817, 7
        %v819 = vsub.s32 %v816, %v818
        %v820 = vrot.slane %v804, %v819
        %v822 = vunpack.c.l.s4 1966171168
        %v823 = vunpack.c.0.s8 %v822
        %v824 = vlaneseq
        %v825 = vshrl.u32 %v824, 7
        %v826 = vsub.s32 %v823, %v825
        %v827 = vrot.slane %v811, %v826
        %v829 = vunpack.c.l.s4 1966171168
        %v830 = vunpack.c.0.s8 %v829
        %v831 = vlaneseq
        %v832 = vshrl.u32 %v831, 7
        %v833 = vsub.s32 %v830, %v832
        %v834 = vrot.slane %v812, %v833
        %v836 = vunpack.c.l.s4 1966171168
        %v837 = vunpack.c.0.s8 %v836
        %v838 = vlaneseq
        %v839 = vshrl.u32 %v838, 7
        %v840 = vsub.s32 %v837, %v839
        %v841 = vrot.slane %v813, %v840
        %v842 = vcombine.high %v820, %v820
        %v843 = vcombine.high %v827, %v827
        %v844 = vcombine.high %v834, %v834
        %v845 = vcombine.high %v841, %v841
        %v846 = vcombine.high %v646, %v646
        %v848 = vunpack.c.l.s4 1966171168
        %v849 = vunpack.c.0.s8 %v848
        %v850 = vlaneseq
        %v851 = vshrl.u32 %v850, 7
        %v852 = vsub.s32 %v849, %v851
        %v853 = vrot.slane %v646, %v852
        %v855 = vunpack.c.l.s4 1966171168
        %v856 = vunpack.c.0.s8 %v855
        %v857 = vlaneseq
        %v858 = vshrl.u32 %v857, 7
        %v859 = vsub.s32 %v856, %v858
        %v860 = vrot.slane %v846, %v859
        %v861 = vcombine.high %v853, %v853
        %v862 = vcombine.high %v860, %v860
        %v864 = vunpack.c.l.s4 1966171168
        %v865 = vunpack.c.0.s8 %v864
        %v866 = vlaneseq
        %v867 = vshrl.u32 %v866, 7
        %v868 = vsub.s32 %v865, %v867
        %v869 = vrot.slane %v853, %v868
        %v871 = vunpack.c.l.s4 1966171168
        %v872 = vunpack.c.0.s8 %v871
        %v873 = vlaneseq
        %v874 = vshrl.u32 %v873, 7
        %v875 = vsub.s32 %v872, %v874
        %v876 = vrot.slane %v860, %v875
        %v878 = vunpack.c.l.s4 1966171168
        %v879 = vunpack.c.0.s8 %v878
        %v880 = vlaneseq
        %v881 = vshrl.u32 %v880, 7
        %v882 = vsub.s32 %v879, %v881
        %v883 = vrot.slane %v861, %v882
        %v885 = vunpack.c.l.s4 1966171168
        %v886 = vunpack.c.0.s8 %v885
        %v887 = vlaneseq
        %v888 = vshrl.u32 %v887, 7
        %v889 = vsub.s32 %v886, %v888
        %v890 = vrot.slane %v862, %v889
        %v891 = vcombine.high %v869, %v869
        %v892 = vcombine.high %v876, %v876
        %v893 = vcombine.high %v883, %v883
        %v894 = vcombine.high %v890, %v890
        %v895 = vlaneseq
        %v896 = vshrl.u32 %v895, 7
        %v897 = vsub.s32 0, %v896
        %v898 = vrot.slane %v820, %v897
        %v899 = vlaneseq
        %v900 = vshrl.u32 %v899, 7
        %v901 = vsub.s32 0, %v900
        %v902 = vrot.slane %v834, %v901
        %v903 = vlaneseq
        %v904 = vshrl.u32 %v903, 7
        %v905 = vsub.s32 0, %v904
        %v906 = vrot.slane %v842, %v905
        %v907 = vlaneseq
        %v908 = vshrl.u32 %v907, 7
        %v909 = vsub.s32 0, %v908
        %v910 = vrot.slane %v844, %v909
        %v911 = vlaneseq
        %v912 = vshrl.u32 %v911, 7
        %v913 = vsub.s32 0, %v912
        %v914 = vrot.slane %v827, %v913
        %v915 = vlaneseq
        %v916 = vshrl.u32 %v915, 7
        %v917 = vsub.s32 0, %v916
        %v918 = vrot.slane %v841, %v917
        %v919 = vlaneseq
        %v920 = vshrl.u32 %v919, 7
        %v921 = vsub.s32 0, %v920
        %v922 = vrot.slane %v843, %v921
        %v923 = vlaneseq
        %v924 = vshrl.u32 %v923, 7
        %v925 = vsub.s32 0, %v924
        %v926 = vrot.slane %v845, %v925
        %v927 = vlaneseq
        %v928 = vshrl.u32 %v927, 7
        %v929 = vsub.s32 0, %v928
        %v930 = vrot.slane %v869, %v929
        %v931 = vlaneseq
        %v932 = vshrl.u32 %v931, 7
        %v933 = vsub.s32 0, %v932
        %v934 = vrot.slane %v883, %v933
        %v935 = vlaneseq
        %v936 = vshrl.u32 %v935, 7
        %v937 = vsub.s32 0, %v936
        %v938 = vrot.slane %v891, %v937
        %v939 = vlaneseq
        %v940 = vshrl.u32 %v939, 7
        %v941 = vsub.s32 0, %v940
        %v942 = vrot.slane %v893, %v941
        %v943 = vlaneseq
        %v944 = vshrl.u32 %v943, 7
        %v945 = vsub.s32 0, %v944
        %v946 = vrot.slane %v876, %v945
        %v947 = vlaneseq
        %v948 = vshrl.u32 %v947, 7
        %v949 = vsub.s32 0, %v948
        %v950 = vrot.slane %v890, %v949
        %v951 = vlaneseq
        %v952 = vshrl.u32 %v951, 7
        %v953 = vsub.s32 0, %v952
        %v954 = vrot.slane %v892, %v953
        %v955 = vlaneseq
        %v956 = vshrl.u32 %v955, 7
        %v957 = vsub.s32 0, %v956
        %v958 = vrot.slane %v894, %v957
        %v975 = vmul.f32 %v898, %v757
        %v976 = vmul.f32 %v898, %v762
        %v977 = vmul.f32 %v902, %v757
        %v978 = vmul.f32 %v902, %v762
        %v979 = vmul.f32 %v906, %v757
        %v980 = vmul.f32 %v906, %v762
        %v981 = vmul.f32 %v910, %v757
        %v982 = vmul.f32 %v910, %v762
        %v983 = vmul.f32 %v914, %v757
        %v984 = vmul.f32 %v914, %v762
        %v985 = vmul.f32 %v918, %v757
        %v986 = vmul.f32 %v918, %v762
        %v987 = vmul.f32 %v922, %v757
        %v988 = vmul.f32 %v922, %v762
        %v989 = vmul.f32 %v926, %v757
        %v990 = vmul.f32 %v926, %v762
        %v991 = vmul.f32 %v930, %v757
        %v992 = vmul.f32 %v930, %v762
        %v993 = vmul.f32 %v934, %v757
        %v994 = vmul.f32 %v934, %v762
        %v995 = vmul.f32 %v938, %v757
        %v996 = vmul.f32 %v938, %v762
        %v997 = vmul.f32 %v942, %v757
        %v998 = vmul.f32 %v942, %v762
        %v999 = vmul.f32 %v946, %v757
        %v1000 = vmul.f32 %v946, %v762
        %v1001 = vmul.f32 %v950, %v757
        %v1002 = vmul.f32 %v950, %v762
        %v1003 = vmul.f32 %v954, %v757
        %v1004 = vmul.f32 %v954, %v762
        %v1005 = vmul.f32 %v958, %v757
        %v1006 = vmul.f32 %v958, %v762
        %v1007 = vadd.f32 %v975, 0.0
        %v1008 = vadd.f32 %v976, 0.0
        %v1009 = vadd.f32 %v977, 0.0
        %v1010 = vadd.f32 %v978, 0.0
        %v1011 = vadd.f32 %v979, 0.0
        %v1012 = vadd.f32 %v980, 0.0
        %v1013 = vadd.f32 %v981, 0.0
        %v1014 = vadd.f32 %v982, 0.0
        %v1015 = vadd.f32 %v983, 0.0
        %v1016 = vadd.f32 %v984, 0.0
        %v1017 = vadd.f32 %v985, 0.0
        %v1018 = vadd.f32 %v986, 0.0
        %v1019 = vadd.f32 %v987, 0.0
        %v1020 = vadd.f32 %v988, 0.0
        %v1021 = vadd.f32 %v989, 0.0
        %v1022 = vadd.f32 %v990, 0.0
        %v1023 = vadd.f32 %v991, 0.0
        %v1024 = vadd.f32 %v992, 0.0
        %v1025 = vadd.f32 %v993, 0.0
        %v1026 = vadd.f32 %v994, 0.0
        %v1027 = vadd.f32 %v995, 0.0
        %v1028 = vadd.f32 %v996, 0.0
        %v1029 = vadd.f32 %v997, 0.0
        %v1030 = vadd.f32 %v998, 0.0
        %v1031 = vadd.f32 %v999, 0.0
        %v1032 = vadd.f32 %v1000, 0.0
        %v1033 = vadd.f32 %v1001, 0.0
        %v1034 = vadd.f32 %v1002, 0.0
        %v1035 = vadd.f32 %v1003, 0.0
        %v1036 = vadd.f32 %v1004, 0.0
        %v1037 = vadd.f32 %v1005, 0.0
        %v1038 = vadd.f32 %v1006, 0.0
        %v1041 = vcombine.high %v651, %v651
        %v1043 = vunpack.c.l.s4 1966171168
        %v1044 = vunpack.c.0.s8 %v1043
        %v1045 = vlaneseq
        %v1046 = vshrl.u32 %v1045, 7
        %v1047 = vsub.s32 %v1044, %v1046
        %v1048 = vrot.slane %v651, %v1047
        %v1050 = vunpack.c.l.s4 1966171168
        %v1051 = vunpack.c.0.s8 %v1050
        %v1052 = vlaneseq
        %v1053 = vshrl.u32 %v1052, 7
        %v1054 = vsub.s32 %v1051, %v1053
        %v1055 = vrot.slane %v1041, %v1054
        %v1056 = vcombine.high %v1048, %v1048
        %v1057 = vcombine.high %v1055, %v1055
        %v1059 = vunpack.c.l.s4 1966171168
        %v1060 = vunpack.c.0.s8 %v1059
        %v1061 = vlaneseq
        %v1062 = vshrl.u32 %v1061, 7
        %v1063 = vsub.s32 %v1060, %v1062
        %v1064 = vrot.slane %v1048, %v1063
        %v1066 = vunpack.c.l.s4 1966171168
        %v1067 = vunpack.c.0.s8 %v1066
        %v1068 = vlaneseq
        %v1069 = vshrl.u32 %v1068, 7
        %v1070 = vsub.s32 %v1067, %v1069
        %v1071 = vrot.slane %v1055, %v1070
        %v1073 = vunpack.c.l.s4 1966171168
        %v1074 = vunpack.c.0.s8 %v1073
        %v1075 = vlaneseq
        %v1076 = vshrl.u32 %v1075, 7
        %v1077 = vsub.s32 %v1074, %v1076
        %v1078 = vrot.slane %v1056, %v1077
        %v1080 = vunpack.c.l.s4 1966171168
        %v1081 = vunpack.c.0.s8 %v1080
        %v1082 = vlaneseq
        %v1083 = vshrl.u32 %v1082, 7
        %v1084 = vsub.s32 %v1081, %v1083
        %v1085 = vrot.slane %v1057, %v1084
        %v1086 = vcombine.high %v1064, %v1064
        %v1087 = vcombine.high %v1071, %v1071
        %v1088 = vcombine.high %v1078, %v1078
        %v1089 = vcombine.high %v1085, %v1085
        %v1090 = vcombine.high %v656, %v656
        %v1092 = vunpack.c.l.s4 1966171168
        %v1093 = vunpack.c.0.s8 %v1092
        %v1094 = vlaneseq
        %v1095 = vshrl.u32 %v1094, 7
        %v1096 = vsub.s32 %v1093, %v1095
        %v1097 = vrot.slane %v656, %v1096
        %v1099 = vunpack.c.l.s4 1966171168
        %v1100 = vunpack.c.0.s8 %v1099
        %v1101 = vlaneseq
        %v1102 = vshrl.u32 %v1101, 7
        %v1103 = vsub.s32 %v1100, %v1102
        %v1104 = vrot.slane %v1090, %v1103
        %v1105 = vcombine.high %v1097, %v1097
        %v1106 = vcombine.high %v1104, %v1104
        %v1108 = vunpack.c.l.s4 1966171168
        %v1109 = vunpack.c.0.s8 %v1108
        %v1110 = vlaneseq
        %v1111 = vshrl.u32 %v1110, 7
        %v1112 = vsub.s32 %v1109, %v1111
        %v1113 = vrot.slane %v1097, %v1112
        %v1115 = vunpack.c.l.s4 1966171168
        %v1116 = vunpack.c.0.s8 %v1115
        %v1117 = vlaneseq
        %v1118 = vshrl.u32 %v1117, 7
        %v1119 = vsub.s32 %v1116, %v1118
        %v1120 = vrot.slane %v1104, %v1119
        %v1122 = vunpack.c.l.s4 1966171168
        %v1123 = vunpack.c.0.s8 %v1122
        %v1124 = vlaneseq
        %v1125 = vshrl.u32 %v1124, 7
        %v1126 = vsub.s32 %v1123, %v1125
        %v1127 = vrot.slane %v1105, %v1126
        %v1129 = vunpack.c.l.s4 1966171168
        %v1130 = vunpack.c.0.s8 %v1129
        %v1131 = vlaneseq
        %v1132 = vshrl.u32 %v1131, 7
        %v1133 = vsub.s32 %v1130, %v1132
        %v1134 = vrot.slane %v1106, %v1133
        %v1135 = vcombine.high %v1113, %v1113
        %v1136 = vcombine.high %v1120, %v1120
        %v1137 = vcombine.high %v1127, %v1127
        %v1138 = vcombine.high %v1134, %v1134
        %v1139 = vlaneseq
        %v1140 = vshrl.u32 %v1139, 7
        %v1141 = vsub.s32 0, %v1140
        %v1142 = vrot.slane %v1064, %v1141
        %v1143 = vlaneseq
        %v1144 = vshrl.u32 %v1143, 7
        %v1145 = vsub.s32 0, %v1144
        %v1146 = vrot.slane %v1078, %v1145
        %v1147 = vlaneseq
        %v1148 = vshrl.u32 %v1147, 7
        %v1149 = vsub.s32 0, %v1148
        %v1150 = vrot.slane %v1086, %v1149
        %v1151 = vlaneseq
        %v1152 = vshrl.u32 %v1151, 7
        %v1153 = vsub.s32 0, %v1152
        %v1154 = vrot.slane %v1088, %v1153
        %v1155 = vlaneseq
        %v1156 = vshrl.u32 %v1155, 7
        %v1157 = vsub.s32 0, %v1156
        %v1158 = vrot.slane %v1071, %v1157
        %v1159 = vlaneseq
        %v1160 = vshrl.u32 %v1159, 7
        %v1161 = vsub.s32 0, %v1160
        %v1162 = vrot.slane %v1085, %v1161
        %v1163 = vlaneseq
        %v1164 = vshrl.u32 %v1163, 7
        %v1165 = vsub.s32 0, %v1164
        %v1166 = vrot.slane %v1087, %v1165
        %v1167 = vlaneseq
        %v1168 = vshrl.u32 %v1167, 7
        %v1169 = vsub.s32 0, %v1168
        %v1170 = vrot.slane %v1089, %v1169
        %v1171 = vlaneseq
        %v1172 = vshrl.u32 %v1171, 7
        %v1173 = vsub.s32 0, %v1172
        %v1174 = vrot.slane %v1113, %v1173
        %v1175 = vlaneseq
        %v1176 = vshrl.u32 %v1175, 7
        %v1177 = vsub.s32 0, %v1176
        %v1178 = vrot.slane %v1127, %v1177
        %v1179 = vlaneseq
        %v1180 = vshrl.u32 %v1179, 7
        %v1181 = vsub.s32 0, %v1180
        %v1182 = vrot.slane %v1135, %v1181
        %v1183 = vlaneseq
        %v1184 = vshrl.u32 %v1183, 7
        %v1185 = vsub.s32 0, %v1184
        %v1186 = vrot.slane %v1137, %v1185
        %v1187 = vlaneseq
        %v1188 = vshrl.u32 %v1187, 7
        %v1189 = vsub.s32 0, %v1188
        %v1190 = vrot.slane %v1120, %v1189
        %v1191 = vlaneseq
        %v1192 = vshrl.u32 %v1191, 7
        %v1193 = vsub.s32 0, %v1192
        %v1194 = vrot.slane %v1134, %v1193
        %v1195 = vlaneseq
        %v1196 = vshrl.u32 %v1195, 7
        %v1197 = vsub.s32 0, %v1196
        %v1198 = vrot.slane %v1136, %v1197
        %v1199 = vlaneseq
        %v1200 = vshrl.u32 %v1199, 7
        %v1201 = vsub.s32 0, %v1200
        %v1202 = vrot.slane %v1138, %v1201
        %v1219 = vmul.f32 %v1142, %v767
        %v1220 = vmul.f32 %v1142, %v772
        %v1221 = vmul.f32 %v1146, %v767
        %v1222 = vmul.f32 %v1146, %v772
        %v1223 = vmul.f32 %v1150, %v767
        %v1224 = vmul.f32 %v1150, %v772
        %v1225 = vmul.f32 %v1154, %v767
        %v1226 = vmul.f32 %v1154, %v772
        %v1227 = vmul.f32 %v1158, %v767
        %v1228 = vmul.f32 %v1158, %v772
        %v1229 = vmul.f32 %v1162, %v767
        %v1230 = vmul.f32 %v1162, %v772
        %v1231 = vmul.f32 %v1166, %v767
        %v1232 = vmul.f32 %v1166, %v772
        %v1233 = vmul.f32 %v1170, %v767
        %v1234 = vmul.f32 %v1170, %v772
        %v1235 = vmul.f32 %v1174, %v767
        %v1236 = vmul.f32 %v1174, %v772
        %v1237 = vmul.f32 %v1178, %v767
        %v1238 = vmul.f32 %v1178, %v772
        %v1239 = vmul.f32 %v1182, %v767
        %v1240 = vmul.f32 %v1182, %v772
        %v1241 = vmul.f32 %v1186, %v767
        %v1242 = vmul.f32 %v1186, %v772
        %v1243 = vmul.f32 %v1190, %v767
        %v1244 = vmul.f32 %v1190, %v772
        %v1245 = vmul.f32 %v1194, %v767
        %v1246 = vmul.f32 %v1194, %v772
        %v1247 = vmul.f32 %v1198, %v767
        %v1248 = vmul.f32 %v1198, %v772
        %v1249 = vmul.f32 %v1202, %v767
        %v1250 = vmul.f32 %v1202, %v772
        %v1251 = vadd.f32 %v1007, %v1219
        %v1252 = vadd.f32 %v1008, %v1220
        %v1253 = vadd.f32 %v1009, %v1221
        %v1254 = vadd.f32 %v1010, %v1222
        %v1255 = vadd.f32 %v1011, %v1223
        %v1256 = vadd.f32 %v1012, %v1224
        %v1257 = vadd.f32 %v1013, %v1225
        %v1258 = vadd.f32 %v1014, %v1226
        %v1259 = vadd.f32 %v1015, %v1227
        %v1260 = vadd.f32 %v1016, %v1228
        %v1261 = vadd.f32 %v1017, %v1229
        %v1262 = vadd.f32 %v1018, %v1230
        %v1263 = vadd.f32 %v1019, %v1231
        %v1264 = vadd.f32 %v1020, %v1232
        %v1265 = vadd.f32 %v1021, %v1233
        %v1266 = vadd.f32 %v1022, %v1234
        %v1267 = vadd.f32 %v1023, %v1235
        %v1268 = vadd.f32 %v1024, %v1236
        %v1269 = vadd.f32 %v1025, %v1237
        %v1270 = vadd.f32 %v1026, %v1238
        %v1271 = vadd.f32 %v1027, %v1239
        %v1272 = vadd.f32 %v1028, %v1240
        %v1273 = vadd.f32 %v1029, %v1241
        %v1274 = vadd.f32 %v1030, %v1242
        %v1275 = vadd.f32 %v1031, %v1243
        %v1276 = vadd.f32 %v1032, %v1244
        %v1277 = vadd.f32 %v1033, %v1245
        %v1278 = vadd.f32 %v1034, %v1246
        %v1279 = vadd.f32 %v1035, %v1247
        %v1280 = vadd.f32 %v1036, %v1248
        %v1281 = vadd.f32 %v1037, %v1249
        %v1282 = vadd.f32 %v1038, %v1250
        %v1285 = vcombine.high %v661, %v661
        %v1287 = vunpack.c.l.s4 1966171168
        %v1288 = vunpack.c.0.s8 %v1287
        %v1289 = vlaneseq
        %v1290 = vshrl.u32 %v1289, 7
        %v1291 = vsub.s32 %v1288, %v1290
        %v1292 = vrot.slane %v661, %v1291
        %v1294 = vunpack.c.l.s4 1966171168
        %v1295 = vunpack.c.0.s8 %v1294
        %v1296 = vlaneseq
        %v1297 = vshrl.u32 %v1296, 7
        %v1298 = vsub.s32 %v1295, %v1297
        %v1299 = vrot.slane %v1285, %v1298
        %v1300 = vcombine.high %v1292, %v1292
        %v1301 = vcombine.high %v1299, %v1299
        %v1303 = vunpack.c.l.s4 1966171168
        %v1304 = vunpack.c.0.s8 %v1303
        %v1305 = vlaneseq
        %v1306 = vshrl.u32 %v1305, 7
        %v1307 = vsub.s32 %v1304, %v1306
        %v1308 = vrot.slane %v1292, %v1307
        %v1310 = vunpack.c.l.s4 1966171168
        %v1311 = vunpack.c.0.s8 %v1310
        %v1312 = vlaneseq
        %v1313 = vshrl.u32 %v1312, 7
        %v1314 = vsub.s32 %v1311, %v1313
        %v1315 = vrot.slane %v1299, %v1314
        %v1317 = vunpack.c.l.s4 1966171168
        %v1318 = vunpack.c.0.s8 %v1317
        %v1319 = vlaneseq
        %v1320 = vshrl.u32 %v1319, 7
        %v1321 = vsub.s32 %v1318, %v1320
        %v1322 = vrot.slane %v1300, %v1321
        %v1324 = vunpack.c.l.s4 1966171168
        %v1325 = vunpack.c.0.s8 %v1324
        %v1326 = vlaneseq
        %v1327 = vshrl.u32 %v1326, 7
        %v1328 = vsub.s32 %v1325, %v1327
        %v1329 = vrot.slane %v1301, %v1328
        %v1330 = vcombine.high %v1308, %v1308
        %v1331 = vcombine.high %v1315, %v1315
        %v1332 = vcombine.high %v1322, %v1322
        %v1333 = vcombine.high %v1329, %v1329
        %v1334 = vcombine.high %v666, %v666
        %v1336 = vunpack.c.l.s4 1966171168
        %v1337 = vunpack.c.0.s8 %v1336
        %v1338 = vlaneseq
        %v1339 = vshrl.u32 %v1338, 7
        %v1340 = vsub.s32 %v1337, %v1339
        %v1341 = vrot.slane %v666, %v1340
        %v1343 = vunpack.c.l.s4 1966171168
        %v1344 = vunpack.c.0.s8 %v1343
        %v1345 = vlaneseq
        %v1346 = vshrl.u32 %v1345, 7
        %v1347 = vsub.s32 %v1344, %v1346
        %v1348 = vrot.slane %v1334, %v1347
        %v1349 = vcombine.high %v1341, %v1341
        %v1350 = vcombine.high %v1348, %v1348
        %v1352 = vunpack.c.l.s4 1966171168
        %v1353 = vunpack.c.0.s8 %v1352
        %v1354 = vlaneseq
        %v1355 = vshrl.u32 %v1354, 7
        %v1356 = vsub.s32 %v1353, %v1355
        %v1357 = vrot.slane %v1341, %v1356
        %v1359 = vunpack.c.l.s4 1966171168
        %v1360 = vunpack.c.0.s8 %v1359
        %v1361 = vlaneseq
        %v1362 = vshrl.u32 %v1361, 7
        %v1363 = vsub.s32 %v1360, %v1362
        %v1364 = vrot.slane %v1348, %v1363
        %v1366 = vunpack.c.l.s4 1966171168
        %v1367 = vunpack.c.0.s8 %v1366
        %v1368 = vlaneseq
        %v1369 = vshrl.u32 %v1368, 7
        %v1370 = vsub.s32 %v1367, %v1369
        %v1371 = vrot.slane %v1349, %v1370
        %v1373 = vunpack.c.l.s4 1966171168
        %v1374 = vunpack.c.0.s8 %v1373
        %v1375 = vlaneseq
        %v1376 = vshrl.u32 %v1375, 7
        %v1377 = vsub.s32 %v1374, %v1376
        %v1378 = vrot.slane %v1350, %v1377
        %v1379 = vcombine.high %v1357, %v1357
        %v1380 = vcombine.high %v1364, %v1364
        %v1381 = vcombine.high %v1371, %v1371
        %v1382 = vcombine.high %v1378, %v1378
        %v1383 = vlaneseq
        %v1384 = vshrl.u32 %v1383, 7
        %v1385 = vsub.s32 0, %v1384
        %v1386 = vrot.slane %v1308, %v1385
        %v1387 = vlaneseq
        %v1388 = vshrl.u32 %v1387, 7
        %v1389 = vsub.s32 0, %v1388
        %v1390 = vrot.slane %v1322, %v1389
        %v1391 = vlaneseq
        %v1392 = vshrl.u32 %v1391, 7
        %v1393 = vsub.s32 0, %v1392
        %v1394 = vrot.slane %v1330, %v1393
        %v1395 = vlaneseq
        %v1396 = vshrl.u32 %v1395, 7
        %v1397 = vsub.s32 0, %v1396
        %v1398 = vrot.slane %v1332, %v1397
        %v1399 = vlaneseq
        %v1400 = vshrl.u32 %v1399, 7
        %v1401 = vsub.s32 0, %v1400
        %v1402 = vrot.slane %v1315, %v1401
        %v1403 = vlaneseq
        %v1404 = vshrl.u32 %v1403, 7
        %v1405 = vsub.s32 0, %v1404
        %v1406 = vrot.slane %v1329, %v1405
        %v1407 = vlaneseq
        %v1408 = vshrl.u32 %v1407, 7
        %v1409 = vsub.s32 0, %v1408
        %v1410 = vrot.slane %v1331, %v1409
        %v1411 = vlaneseq
        %v1412 = vshrl.u32 %v1411, 7
        %v1413 = vsub.s32 0, %v1412
        %v1414 = vrot.slane %v1333, %v1413
        %v1415 = vlaneseq
        %v1416 = vshrl.u32 %v1415, 7
        %v1417 = vsub.s32 0, %v1416
        %v1418 = vrot.slane %v1357, %v1417
        %v1419 = vlaneseq
        %v1420 = vshrl.u32 %v1419, 7
        %v1421 = vsub.s32 0, %v1420
        %v1422 = vrot.slane %v1371, %v1421
        %v1423 = vlaneseq
        %v1424 = vshrl.u32 %v1423, 7
        %v1425 = vsub.s32 0, %v1424
        %v1426 = vrot.slane %v1379, %v1425
        %v1427 = vlaneseq
        %v1428 = vshrl.u32 %v1427, 7
        %v1429 = vsub.s32 0, %v1428
        %v1430 = vrot.slane %v1381, %v1429
        %v1431 = vlaneseq
        %v1432 = vshrl.u32 %v1431, 7
        %v1433 = vsub.s32 0, %v1432
        %v1434 = vrot.slane %v1364, %v1433
        %v1435 = vlaneseq
        %v1436 = vshrl.u32 %v1435, 7
        %v1437 = vsub.s32 0, %v1436
        %v1438 = vrot.slane %v1378, %v1437
        %v1439 = vlaneseq
        %v1440 = vshrl.u32 %v1439, 7
        %v1441 = vsub.s32 0, %v1440
        %v1442 = vrot.slane %v1380, %v1441
        %v1443 = vlaneseq
        %v1444 = vshrl.u32 %v1443, 7
        %v1445 = vsub.s32 0, %v1444
        %v1446 = vrot.slane %v1382, %v1445
        %v1463 = vmul.f32 %v1386, %v777
        %v1464 = vmul.f32 %v1386, %v782
        %v1465 = vmul.f32 %v1390, %v777
        %v1466 = vmul.f32 %v1390, %v782
        %v1467 = vmul.f32 %v1394, %v777
        %v1468 = vmul.f32 %v1394, %v782
        %v1469 = vmul.f32 %v1398, %v777
        %v1470 = vmul.f32 %v1398, %v782
        %v1471 = vmul.f32 %v1402, %v777
        %v1472 = vmul.f32 %v1402, %v782
        %v1473 = vmul.f32 %v1406, %v777
        %v1474 = vmul.f32 %v1406, %v782
        %v1475 = vmul.f32 %v1410, %v777
        %v1476 = vmul.f32 %v1410, %v782
        %v1477 = vmul.f32 %v1414, %v777
        %v1478 = vmul.f32 %v1414, %v782
        %v1479 = vmul.f32 %v1418, %v777
        %v1480 = vmul.f32 %v1418, %v782
        %v1481 = vmul.f32 %v1422, %v777
        %v1482 = vmul.f32 %v1422, %v782
        %v1483 = vmul.f32 %v1426, %v777
        %v1484 = vmul.f32 %v1426, %v782
        %v1485 = vmul.f32 %v1430, %v777
        %v1486 = vmul.f32 %v1430, %v782
        %v1487 = vmul.f32 %v1434, %v777
        %v1488 = vmul.f32 %v1434, %v782
        %v1489 = vmul.f32 %v1438, %v777
        %v1490 = vmul.f32 %v1438, %v782
        %v1491 = vmul.f32 %v1442, %v777
        %v1492 = vmul.f32 %v1442, %v782
        %v1493 = vmul.f32 %v1446, %v777
        %v1494 = vmul.f32 %v1446, %v782
        %v1495 = vadd.f32 %v1251, %v1463
        %v1496 = vadd.f32 %v1252, %v1464
        %v1497 = vadd.f32 %v1253, %v1465
        %v1498 = vadd.f32 %v1254, %v1466
        %v1499 = vadd.f32 %v1255, %v1467
        %v1500 = vadd.f32 %v1256, %v1468
        %v1501 = vadd.f32 %v1257, %v1469
        %v1502 = vadd.f32 %v1258, %v1470
        %v1503 = vadd.f32 %v1259, %v1471
        %v1504 = vadd.f32 %v1260, %v1472
        %v1505 = vadd.f32 %v1261, %v1473
        %v1506 = vadd.f32 %v1262, %v1474
        %v1507 = vadd.f32 %v1263, %v1475
        %v1508 = vadd.f32 %v1264, %v1476
        %v1509 = vadd.f32 %v1265, %v1477
        %v1510 = vadd.f32 %v1266, %v1478
        %v1511 = vadd.f32 %v1267, %v1479
        %v1512 = vadd.f32 %v1268, %v1480
        %v1513 = vadd.f32 %v1269, %v1481
        %v1514 = vadd.f32 %v1270, %v1482
        %v1515 = vadd.f32 %v1271, %v1483
        %v1516 = vadd.f32 %v1272, %v1484
        %v1517 = vadd.f32 %v1273, %v1485
        %v1518 = vadd.f32 %v1274, %v1486
        %v1519 = vadd.f32 %v1275, %v1487
        %v1520 = vadd.f32 %v1276, %v1488
        %v1521 = vadd.f32 %v1277, %v1489
        %v1522 = vadd.f32 %v1278, %v1490
        %v1523 = vadd.f32 %v1279, %v1491
        %v1524 = vadd.f32 %v1280, %v1492
        %v1525 = vadd.f32 %v1281, %v1493
        %v1526 = vadd.f32 %v1282, %v1494
        %v1529 = vcombine.high %v671, %v671
        %v1531 = vunpack.c.l.s4 1966171168
        %v1532 = vunpack.c.0.s8 %v1531
        %v1533 = vlaneseq
        %v1534 = vshrl.u32 %v1533, 7
        %v1535 = vsub.s32 %v1532, %v1534
        %v1536 = vrot.slane %v671, %v1535
        %v1538 = vunpack.c.l.s4 1966171168
        %v1539 = vunpack.c.0.s8 %v1538
        %v1540 = vlaneseq
        %v1541 = vshrl.u32 %v1540, 7
        %v1542 = vsub.s32 %v1539, %v1541
        %v1543 = vrot.slane %v1529, %v1542
        %v1544 = vcombine.high %v1536, %v1536
        %v1545 = vcombine.high %v1543, %v1543
        %v1547 = vunpack.c.l.s4 1966171168
        %v1548 = vunpack.c.0.s8 %v1547
        %v1549 = vlaneseq
        %v1550 = vshrl.u32 %v1549, 7
        %v1551 = vsub.s32 %v1548, %v1550
        %v1552 = vrot.slane %v1536, %v1551
        %v1554 = vunpack.c.l.s4 1966171168
        %v1555 = vunpack.c.0.s8 %v1554
        %v1556 = vlaneseq
        %v1557 = vshrl.u32 %v1556, 7
        %v1558 = vsub.s32 %v1555, %v1557
        %v1559 = vrot.slane %v1543, %v1558
        %v1561 = vunpack.c.l.s4 1966171168
        %v1562 = vunpack.c.0.s8 %v1561
        %v1563 = vlaneseq
        %v1564 = vshrl.u32 %v1563, 7
        %v1565 = vsub.s32 %v1562, %v1564
        %v1566 = vrot.slane %v1544, %v1565
        %v1568 = vunpack.c.l.s4 1966171168
        %v1569 = vunpack.c.0.s8 %v1568
        %v1570 = vlaneseq
        %v1571 = vshrl.u32 %v1570, 7
        %v1572 = vsub.s32 %v1569, %v1571
        %v1573 = vrot.slane %v1545, %v1572
        %v1574 = vcombine.high %v1552, %v1552
        %v1575 = vcombine.high %v1559, %v1559
        %v1576 = vcombine.high %v1566, %v1566
        %v1577 = vcombine.high %v1573, %v1573
        %v1578 = vcombine.high %v676, %v676
        %v1580 = vunpack.c.l.s4 1966171168
        %v1581 = vunpack.c.0.s8 %v1580
        %v1582 = vlaneseq
        %v1583 = vshrl.u32 %v1582, 7
        %v1584 = vsub.s32 %v1581, %v1583
        %v1585 = vrot.slane %v676, %v1584
        %v1587 = vunpack.c.l.s4 1966171168
        %v1588 = vunpack.c.0.s8 %v1587
        %v1589 = vlaneseq
        %v1590 = vshrl.u32 %v1589, 7
        %v1591 = vsub.s32 %v1588, %v1590
        %v1592 = vrot.slane %v1578, %v1591
        %v1593 = vcombine.high %v1585, %v1585
        %v1594 = vcombine.high %v1592, %v1592
        %v1596 = vunpack.c.l.s4 1966171168
        %v1597 = vunpack.c.0.s8 %v1596
        %v1598 = vlaneseq
        %v1599 = vshrl.u32 %v1598, 7
        %v1600 = vsub.s32 %v1597, %v1599
        %v1601 = vrot.slane %v1585, %v1600
        %v1603 = vunpack.c.l.s4 1966171168
        %v1604 = vunpack.c.0.s8 %v1603
        %v1605 = vlaneseq
        %v1606 = vshrl.u32 %v1605, 7
        %v1607 = vsub.s32 %v1604, %v1606
        %v1608 = vrot.slane %v1592, %v1607
        %v1610 = vunpack.c.l.s4 1966171168
        %v1611 = vunpack.c.0.s8 %v1610
        %v1612 = vlaneseq
        %v1613 = vshrl.u32 %v1612, 7
        %v1614 = vsub.s32 %v1611, %v1613
        %v1615 = vrot.slane %v1593, %v1614
        %v1617 = vunpack.c.l.s4 1966171168
        %v1618 = vunpack.c.0.s8 %v1617
        %v1619 = vlaneseq
        %v1620 = vshrl.u32 %v1619, 7
        %v1621 = vsub.s32 %v1618, %v1620
        %v1622 = vrot.slane %v1594, %v1621
        %v1623 = vcombine.high %v1601, %v1601
        %v1624 = vcombine.high %v1608, %v1608
        %v1625 = vcombine.high %v1615, %v1615
        %v1626 = vcombine.high %v1622, %v1622
        %v1627 = vlaneseq
        %v1628 = vshrl.u32 %v1627, 7
        %v1629 = vsub.s32 0, %v1628
        %v1630 = vrot.slane %v1552, %v1629
        %v1631 = vlaneseq
        %v1632 = vshrl.u32 %v1631, 7
        %v1633 = vsub.s32 0, %v1632
        %v1634 = vrot.slane %v1566, %v1633
        %v1635 = vlaneseq
        %v1636 = vshrl.u32 %v1635, 7
        %v1637 = vsub.s32 0, %v1636
        %v1638 = vrot.slane %v1574, %v1637
        %v1639 = vlaneseq
        %v1640 = vshrl.u32 %v1639, 7
        %v1641 = vsub.s32 0, %v1640
        %v1642 = vrot.slane %v1576, %v1641
        %v1643 = vlaneseq
        %v1644 = vshrl.u32 %v1643, 7
        %v1645 = vsub.s32 0, %v1644
        %v1646 = vrot.slane %v1559, %v1645
        %v1647 = vlaneseq
        %v1648 = vshrl.u32 %v1647, 7
        %v1649 = vsub.s32 0, %v1648
        %v1650 = vrot.slane %v1573, %v1649
        %v1651 = vlaneseq
        %v1652 = vshrl.u32 %v1651, 7
        %v1653 = vsub.s32 0, %v1652
        %v1654 = vrot.slane %v1575, %v1653
        %v1655 = vlaneseq
        %v1656 = vshrl.u32 %v1655, 7
        %v1657 = vsub.s32 0, %v1656
        %v1658 = vrot.slane %v1577, %v1657
        %v1659 = vlaneseq
        %v1660 = vshrl.u32 %v1659, 7
        %v1661 = vsub.s32 0, %v1660
        %v1662 = vrot.slane %v1601, %v1661
        %v1663 = vlaneseq
        %v1664 = vshrl.u32 %v1663, 7
        %v1665 = vsub.s32 0, %v1664
        %v1666 = vrot.slane %v1615, %v1665
        %v1667 = vlaneseq
        %v1668 = vshrl.u32 %v1667, 7
        %v1669 = vsub.s32 0, %v1668
        %v1670 = vrot.slane %v1623, %v1669
        %v1671 = vlaneseq
        %v1672 = vshrl.u32 %v1671, 7
        %v1673 = vsub.s32 0, %v1672
        %v1674 = vrot.slane %v1625, %v1673
        %v1675 = vlaneseq
        %v1676 = vshrl.u32 %v1675, 7
        %v1677 = vsub.s32 0, %v1676
        %v1678 = vrot.slane %v1608, %v1677
        %v1679 = vlaneseq
        %v1680 = vshrl.u32 %v1679, 7
        %v1681 = vsub.s32 0, %v1680
        %v1682 = vrot.slane %v1622, %v1681
        %v1683 = vlaneseq
        %v1684 = vshrl.u32 %v1683, 7
        %v1685 = vsub.s32 0, %v1684
        %v1686 = vrot.slane %v1624, %v1685
        %v1687 = vlaneseq
        %v1688 = vshrl.u32 %v1687, 7
        %v1689 = vsub.s32 0, %v1688
        %v1690 = vrot.slane %v1626, %v1689
        %v1707 = vmul.f32 %v1630, %v787
        %v1708 = vmul.f32 %v1630, %v792
        %v1709 = vmul.f32 %v1634, %v787
        %v1710 = vmul.f32 %v1634, %v792
        %v1711 = vmul.f32 %v1638, %v787
        %v1712 = vmul.f32 %v1638, %v792
        %v1713 = vmul.f32 %v1642, %v787
        %v1714 = vmul.f32 %v1642, %v792
        %v1715 = vmul.f32 %v1646, %v787
        %v1716 = vmul.f32 %v1646, %v792
        %v1717 = vmul.f32 %v1650, %v787
        %v1718 = vmul.f32 %v1650, %v792
        %v1719 = vmul.f32 %v1654, %v787
        %v1720 = vmul.f32 %v1654, %v792
        %v1721 = vmul.f32 %v1658, %v787
        %v1722 = vmul.f32 %v1658, %v792
        %v1723 = vmul.f32 %v1662, %v787
        %v1724 = vmul.f32 %v1662, %v792
        %v1725 = vmul.f32 %v1666, %v787
        %v1726 = vmul.f32 %v1666, %v792
        %v1727 = vmul.f32 %v1670, %v787
        %v1728 = vmul.f32 %v1670, %v792
        %v1729 = vmul.f32 %v1674, %v787
        %v1730 = vmul.f32 %v1674, %v792
        %v1731 = vmul.f32 %v1678, %v787
        %v1732 = vmul.f32 %v1678, %v792
        %v1733 = vmul.f32 %v1682, %v787
        %v1734 = vmul.f32 %v1682, %v792
        %v1735 = vmul.f32 %v1686, %v787
        %v1736 = vmul.f32 %v1686, %v792
        %v1737 = vmul.f32 %v1690, %v787
        %v1738 = vmul.f32 %v1690, %v792
        %v1739 = vadd.f32 %v1495, %v1707
        %v1740 = vadd.f32 %v1496, %v1708
        %v1741 = vadd.f32 %v1497, %v1709
        %v1742 = vadd.f32 %v1498, %v1710
        %v1743 = vadd.f32 %v1499, %v1711
        %v1744 = vadd.f32 %v1500, %v1712
        %v1745 = vadd.f32 %v1501, %v1713
        %v1746 = vadd.f32 %v1502, %v1714
        %v1747 = vadd.f32 %v1503, %v1715
        %v1748 = vadd.f32 %v1504, %v1716
        %v1749 = vadd.f32 %v1505, %v1717
        %v1750 = vadd.f32 %v1506, %v1718
        %v1751 = vadd.f32 %v1507, %v1719
        %v1752 = vadd.f32 %v1508, %v1720
        %v1753 = vadd.f32 %v1509, %v1721
        %v1754 = vadd.f32 %v1510, %v1722
        %v1755 = vadd.f32 %v1511, %v1723
        %v1756 = vadd.f32 %v1512, %v1724
        %v1757 = vadd.f32 %v1513, %v1725
        %v1758 = vadd.f32 %v1514, %v1726
        %v1759 = vadd.f32 %v1515, %v1727
        %v1760 = vadd.f32 %v1516, %v1728
        %v1761 = vadd.f32 %v1517, %v1729
        %v1762 = vadd.f32 %v1518, %v1730
        %v1763 = vadd.f32 %v1519, %v1731
        %v1764 = vadd.f32 %v1520, %v1732
        %v1765 = vadd.f32 %v1521, %v1733
        %v1766 = vadd.f32 %v1522, %v1734
        %v1767 = vadd.f32 %v1523, %v1735
        %v1768 = vadd.f32 %v1524, %v1736
        %v1769 = vadd.f32 %v1525, %v1737
        %v1770 = vadd.f32 %v1526, %v1738
        %v1771 = vmul.f32 %v1739, 0.25
        %v1772 = vmul.f32 %v1740, 0.25
        %v1773 = vmul.f32 %v1741, 0.25
        %v1774 = vmul.f32 %v1742, 0.25
        %v1775 = vmul.f32 %v1743, 0.25
        %v1776 = vmul.f32 %v1744, 0.25
        %v1777 = vmul.f32 %v1745, 0.25
        %v1778 = vmul.f32 %v1746, 0.25
        %v1779 = vmul.f32 %v1747, 0.25
        %v1780 = vmul.f32 %v1748, 0.25
        %v1781 = vmul.f32 %v1749, 0.25
        %v1782 = vmul.f32 %v1750, 0.25
        %v1783 = vmul.f32 %v1751, 0.25
        %v1784 = vmul.f32 %v1752, 0.25
        %v1785 = vmul.f32 %v1753, 0.25
        %v1786 = vmul.f32 %v1754, 0.25
        %v1787 = vmul.f32 %v1755, 0.25
        %v1788 = vmul.f32 %v1756, 0.25
        %v1789 = vmul.f32 %v1757, 0.25
        %v1790 = vmul.f32 %v1758, 0.25
        %v1791 = vmul.f32 %v1759, 0.25
        %v1792 = vmul.f32 %v1760, 0.25
        %v1793 = vmul.f32 %v1761, 0.25
        %v1794 = vmul.f32 %v1762, 0.25
        %v1795 = vmul.f32 %v1763, 0.25
        %v1796 = vmul.f32 %v1764, 0.25
        %v1797 = vmul.f32 %v1765, 0.25
        %v1798 = vmul.f32 %v1766, 0.25
        %v1799 = vmul.f32 %v1767, 0.25
        %v1800 = vmul.f32 %v1768, 0.25
        %v1801 = vmul.f32 %v1769, 0.25
        %v1802 = vmul.f32 %v1770, 0.25
        %v1803 = vld [vmem:[#allocation8] sm:$0xff]
        %v1804 = vld [vmem:[#allocation8 + $0x8] sm:$0xff]
        %v1805 = vld [vmem:[#allocation8 + $0x10] sm:$0xff]
        %v1806 = vld [vmem:[#allocation8 + $0x18] sm:$0xff]
        %v1807 = vld [vmem:[%s8] sm:$0x1]
        %v1809 = vlaneseq
        %v1810 = vshrl.u32 %v1809, 7
        %v1811 = vsub.s32 0, %v1810
        %v1812 = vrot.slane %v1807, %v1811
        %v1815 = vsel %vm403, %v1771, 0
        %v1818 = vsel %vm403, %v1772, 0
        %v1821 = vsel %vm403, %v1773, 0
        %v1824 = vsel %vm403, %v1774, 0
        %v1827 = vsel %vm403, %v1775, 0
        %v1830 = vsel %vm403, %v1776, 0
        %v1833 = vsel %vm403, %v1777, 0
        %v1836 = vsel %vm403, %v1778, 0
        %v1839 = vsel %vm403, %v1779, 0
        %v1842 = vsel %vm403, %v1780, 0
        %v1845 = vsel %vm403, %v1781, 0
        %v1848 = vsel %vm403, %v1782, 0
        %v1851 = vsel %vm403, %v1783, 0
        %v1854 = vsel %vm403, %v1784, 0
        %v1857 = vsel %vm403, %v1785, 0
        %v1860 = vsel %vm403, %v1786, 0
        %v1863 = vsel %vm403, %v1787, 0
        %v1866 = vsel %vm403, %v1788, 0
        %v1869 = vsel %vm403, %v1789, 0
        %v1872 = vsel %vm403, %v1790, 0
        %v1875 = vsel %vm403, %v1791, 0
        %v1878 = vsel %vm403, %v1792, 0
        %v1881 = vsel %vm403, %v1793, 0
        %v1884 = vsel %vm403, %v1794, 0
        %v1887 = vsel %vm403, %v1795, 0
        %v1890 = vsel %vm403, %v1796, 0
        %v1893 = vsel %vm403, %v1797, 0
        %v1896 = vsel %vm403, %v1798, 0
        %v1899 = vsel %vm403, %v1799, 0
        %v1902 = vsel %vm403, %v1800, 0
        %v1905 = vsel %vm403, %v1801, 0
        %v1908 = vsel %vm403, %v1802, 0
        %1910 = vmatprep.subr.mxu0 0.0
        %1911 = vmatpush1.msra.mxu0 %v1803
        %1912 = vmatprep.subr.mxu0 0.0
        %1913 = vmatpush1.msra.mxu0 %v1804
        %1914 = vmatprep.subr.mxu0 0.0
        %1915 = vmatpush1.msra.mxu0 %v1805
        %1916 = vmatprep.subr.mxu0 0.0
        %1917 = vmatpush1.msra.mxu0 %v1806
        %1918 = vmatprep.subr.mxu0 0.0
        %1919 = vmatpush1.msra.mxu0 0.0
        %1920 = vmatprep.subr.mxu0 0.0
        %1921 = vmatpush1.msra.mxu0 0.0
        %1922 = vmatprep.subr.mxu0 0.0
        %1923 = vmatpush1.msra.mxu0 0.0
        %1924 = vmatprep.subr.mxu0 0.0
        %1925 = vmatpush1.msra.mxu0 0.0
        %1926 = vmatprep.subr.mxu0 0.0
        %1927 = vmatpush1.msra.mxu0 0.0
        %1928 = vmatprep.subr.mxu0 0.0
        %1929 = vmatpush1.msra.mxu0 0.0
        %1930 = vmatprep.subr.mxu0 0.0
        %1931 = vmatpush1.msra.mxu0 0.0
        %1932 = vmatprep.subr.mxu0 0.0
        %1933 = vmatpush1.msra.mxu0 0.0
        %1934 = vmatprep.subr.mxu0 0.0
        %1935 = vmatpush1.msra.mxu0 0.0
        %1936 = vmatprep.subr.mxu0 0.0
        %1937 = vmatpush1.msra.mxu0 0.0
        %1938 = vmatprep.subr.mxu0 0.0
        %1939 = vmatpush1.msra.mxu0 0.0
        %1940 = vmatprep.subr.mxu0 0.0
        %1941 = vmatpush1.msra.mxu0 0.0
        %1942 = vmatprep.subr.mxu0 0.0
        %1943 = vmatpush1.msra.mxu0 0.0
        %1944 = vmatprep.subr.mxu0 0.0
        %1945 = vmatpush1.msra.mxu0 0.0
        %1946 = vmatprep.subr.mxu0 0.0
        %1947 = vmatpush1.msra.mxu0 0.0
        %1948 = vmatprep.subr.mxu0 0.0
        %1949 = vmatpush1.msra.mxu0 0.0
        %1950 = vmatprep.subr.mxu0 0.0
        %1951 = vmatpush1.msra.mxu0 0.0
        %1952 = vmatprep.subr.mxu0 0.0
        %1953 = vmatpush1.msra.mxu0 0.0
        %1954 = vmatprep.subr.mxu0 0.0
        %1955 = vmatpush1.msra.mxu0 0.0
        %1956 = vmatprep.subr.mxu0 0.0
        %1957 = vmatpush1.msra.mxu0 0.0
        %1958 = vmatprep.subr.mxu0 0.0
        %1959 = vmatpush1.msra.mxu0 0.0
        %1960 = vmatprep.subr.mxu0 0.0
        %1961 = vmatpush1.msra.mxu0 0.0
        %1962 = vmatprep.subr.mxu0 0.0
        %1963 = vmatpush1.msra.mxu0 0.0
        %1964 = vmatprep.subr.mxu0 0.0
        %1965 = vmatpush1.msra.mxu0 0.0
        %1966 = vmatprep.subr.mxu0 0.0
        %1967 = vmatpush1.msra.mxu0 0.0
        %1968 = vmatprep.subr.mxu0 0.0
        %1969 = vmatpush1.msra.mxu0 0.0
        %1970 = vmatprep.subr.mxu0 0.0
        %1971 = vmatpush1.msra.mxu0 0.0
        %1972 = vmatprep.subr.mxu0 0.0
        %1973 = vmatpush1.msra.mxu0 0.0
        %1974 = vmatprep.mubr.f32.mxu0 0.0
        %1975 = vmatmul.mubr.f32.gmra.mrb[0].mxu0 %v1815
        %v1976 = vpop.f32.mrb[0].mxu0
        %v1977 = vadd.f32 %v1812, %v1976
        %v1978 = vpop.f32.mrb[0].mxu0
        %1979 = vmatprep.mubr.f32.mxu0 0.0
        %1980 = vmatmul.mubr.f32.gmra.mrb[0].mxu0 %v1818
        %v1981 = vpop.f32.mrb[0].mxu0
        %v1982 = vadd.f32 %v1812, %v1981
        %v1983 = vpop.f32.mrb[0].mxu0
        %1984 = vmatprep.mubr.f32.mxu0 0.0
        %1985 = vmatmul.mubr.f32.gmra.mrb[0].mxu0 %v1821
        %v1986 = vpop.f32.mrb[0].mxu0
        %v1987 = vadd.f32 %v1812, %v1986
        %v1988 = vpop.f32.mrb[0].mxu0
        %1989 = vmatprep.mubr.f32.mxu0 0.0
        %1990 = vmatmul.mubr.f32.gmra.mrb[0].mxu0 %v1824
        %v1991 = vpop.f32.mrb[0].mxu0
        %v1992 = vadd.f32 %v1812, %v1991
        %v1993 = vpop.f32.mrb[0].mxu0
        %1994 = vmatprep.mubr.f32.mxu0 0.0
        %1995 = vmatmul.mubr.f32.gmra.mrb[0].mxu0 %v1827
        %v1996 = vpop.f32.mrb[0].mxu0
        %v1997 = vadd.f32 %v1812, %v1996
        %v1998 = vpop.f32.mrb[0].mxu0
        %1999 = vmatprep.mubr.f32.mxu0 0.0
        %2000 = vmatmul.mubr.f32.gmra.mrb[0].mxu0 %v1830
        %v2001 = vpop.f32.mrb[0].mxu0
        %v2002 = vadd.f32 %v1812, %v2001
        %v2003 = vpop.f32.mrb[0].mxu0
        %2004 = vmatprep.mubr.f32.mxu0 0.0
        %2005 = vmatmul.mubr.f32.gmra.mrb[0].mxu0 %v1833
        %v2006 = vpop.f32.mrb[0].mxu0
        %v2007 = vadd.f32 %v1812, %v2006
        %v2008 = vpop.f32.mrb[0].mxu0
        %2009 = vmatprep.mubr.f32.mxu0 0.0
        %2010 = vmatmul.mubr.f32.gmra.mrb[0].mxu0 %v1836
        %v2011 = vpop.f32.mrb[0].mxu0
        %v2012 = vadd.f32 %v1812, %v2011
        %v2013 = vpop.f32.mrb[0].mxu0
        %2014 = vmatprep.mubr.f32.mxu0 0.0
        %2015 = vmatmul.mubr.f32.gmra.mrb[0].mxu0 %v1839
        %v2016 = vpop.f32.mrb[0].mxu0
        %v2017 = vadd.f32 %v1812, %v2016
        %v2018 = vpop.f32.mrb[0].mxu0
        %2019 = vmatprep.mubr.f32.mxu0 0.0
        %2020 = vmatmul.mubr.f32.gmra.mrb[0].mxu0 %v1842
        %v2021 = vpop.f32.mrb[0].mxu0
        %v2022 = vadd.f32 %v1812, %v2021
        %v2023 = vpop.f32.mrb[0].mxu0
        %2024 = vmatprep.mubr.f32.mxu0 0.0
        %2025 = vmatmul.mubr.f32.gmra.mrb[0].mxu0 %v1845
        %v2026 = vpop.f32.mrb[0].mxu0
        %v2027 = vadd.f32 %v1812, %v2026
        %v2028 = vpop.f32.mrb[0].mxu0
        %2029 = vmatprep.mubr.f32.mxu0 0.0
        %2030 = vmatmul.mubr.f32.gmra.mrb[0].mxu0 %v1848
        %v2031 = vpop.f32.mrb[0].mxu0
        %v2032 = vadd.f32 %v1812, %v2031
        %v2033 = vpop.f32.mrb[0].mxu0
        %2034 = vmatprep.mubr.f32.mxu0 0.0
        %2035 = vmatmul.mubr.f32.gmra.mrb[0].mxu0 %v1851
        %v2036 = vpop.f32.mrb[0].mxu0
        %v2037 = vadd.f32 %v1812, %v2036
        %v2038 = vpop.f32.mrb[0].mxu0
        %2039 = vmatprep.mubr.f32.mxu0 0.0
        %2040 = vmatmul.mubr.f32.gmra.mrb[0].mxu0 %v1854
        %v2041 = vpop.f32.mrb[0].mxu0
        %v2042 = vadd.f32 %v1812, %v2041
        %v2043 = vpop.f32.mrb[0].mxu0
        %2044 = vmatprep.mubr.f32.mxu0 0.0
        %2045 = vmatmul.mubr.f32.gmra.mrb[0].mxu0 %v1857
        %v2046 = vpop.f32.mrb[0].mxu0
        %v2047 = vadd.f32 %v1812, %v2046
        %v2048 = vpop.f32.mrb[0].mxu0
        %2049 = vmatprep.mubr.f32.mxu0 0.0
        %2050 = vmatmul.mubr.f32.gmra.mrb[0].mxu0 %v1860
        %v2051 = vpop.f32.mrb[0].mxu0
        %v2052 = vadd.f32 %v1812, %v2051
        %v2053 = vpop.f32.mrb[0].mxu0
        %2054 = vmatprep.mubr.f32.mxu0 0.0
        %2055 = vmatmul.mubr.f32.gmra.mrb[0].mxu0 %v1863
        %v2056 = vpop.f32.mrb[0].mxu0
        %v2057 = vadd.f32 %v1812, %v2056
        %v2058 = vpop.f32.mrb[0].mxu0
        %2059 = vmatprep.mubr.f32.mxu0 0.0
        %2060 = vmatmul.mubr.f32.gmra.mrb[0].mxu0 %v1866
        %v2061 = vpop.f32.mrb[0].mxu0
        %v2062 = vadd.f32 %v1812, %v2061
        %v2063 = vpop.f32.mrb[0].mxu0
        %2064 = vmatprep.mubr.f32.mxu0 0.0
        %2065 = vmatmul.mubr.f32.gmra.mrb[0].mxu0 %v1869
        %v2066 = vpop.f32.mrb[0].mxu0
        %v2067 = vadd.f32 %v1812, %v2066
        %v2068 = vpop.f32.mrb[0].mxu0
        %2069 = vmatprep.mubr.f32.mxu0 0.0
        %2070 = vmatmul.mubr.f32.gmra.mrb[0].mxu0 %v1872
        %v2071 = vpop.f32.mrb[0].mxu0
        %v2072 = vadd.f32 %v1812, %v2071
        %v2073 = vpop.f32.mrb[0].mxu0
        %2074 = vmatprep.mubr.f32.mxu0 0.0
        %2075 = vmatmul.mubr.f32.gmra.mrb[0].mxu0 %v1875
        %v2076 = vpop.f32.mrb[0].mxu0
        %v2077 = vadd.f32 %v1812, %v2076
        %v2078 = vpop.f32.mrb[0].mxu0
        %2079 = vmatprep.mubr.f32.mxu0 0.0
        %2080 = vmatmul.mubr.f32.gmra.mrb[0].mxu0 %v1878
        %v2081 = vpop.f32.mrb[0].mxu0
        %v2082 = vadd.f32 %v1812, %v2081
        %v2083 = vpop.f32.mrb[0].mxu0
        %2084 = vmatprep.mubr.f32.mxu0 0.0
        %2085 = vmatmul.mubr.f32.gmra.mrb[0].mxu0 %v1881
        %v2086 = vpop.f32.mrb[0].mxu0
        %v2087 = vadd.f32 %v1812, %v2086
        %v2088 = vpop.f32.mrb[0].mxu0
        %2089 = vmatprep.mubr.f32.mxu0 0.0
        %2090 = vmatmul.mubr.f32.gmra.mrb[0].mxu0 %v1884
        %v2091 = vpop.f32.mrb[0].mxu0
        %v2092 = vadd.f32 %v1812, %v2091
        %v2093 = vpop.f32.mrb[0].mxu0
        %2094 = vmatprep.mubr.f32.mxu0 0.0
        %2095 = vmatmul.mubr.f32.gmra.mrb[0].mxu0 %v1887
        %v2096 = vpop.f32.mrb[0].mxu0
        %v2097 = vadd.f32 %v1812, %v2096
        %v2098 = vpop.f32.mrb[0].mxu0
        %2099 = vmatprep.mubr.f32.mxu0 0.0
        %2100 = vmatmul.mubr.f32.gmra.mrb[0].mxu0 %v1890
        %v2101 = vpop.f32.mrb[0].mxu0
        %v2102 = vadd.f32 %v1812, %v2101
        %v2103 = vpop.f32.mrb[0].mxu0
        %2104 = vmatprep.mubr.f32.mxu0 0.0
        %2105 = vmatmul.mubr.f32.gmra.mrb[0].mxu0 %v1893
        %v2106 = vpop.f32.mrb[0].mxu0
        %v2107 = vadd.f32 %v1812, %v2106
        %v2108 = vpop.f32.mrb[0].mxu0
        %2109 = vmatprep.mubr.f32.mxu0 0.0
        %2110 = vmatmul.mubr.f32.gmra.mrb[0].mxu0 %v1896
        %v2111 = vpop.f32.mrb[0].mxu0
        %v2112 = vadd.f32 %v1812, %v2111
        %v2113 = vpop.f32.mrb[0].mxu0
        %2114 = vmatprep.mubr.f32.mxu0 0.0
        %2115 = vmatmul.mubr.f32.gmra.mrb[0].mxu0 %v1899
        %v2116 = vpop.f32.mrb[0].mxu0
        %v2117 = vadd.f32 %v1812, %v2116
        %v2118 = vpop.f32.mrb[0].mxu0
        %2119 = vmatprep.mubr.f32.mxu0 0.0
        %2120 = vmatmul.mubr.f32.gmra.mrb[0].mxu0 %v1902
        %v2121 = vpop.f32.mrb[0].mxu0
        %v2122 = vadd.f32 %v1812, %v2121
        %v2123 = vpop.f32.mrb[0].mxu0
        %2124 = vmatprep.mubr.f32.mxu0 0.0
        %2125 = vmatmul.mubr.f32.gmra.mrb[0].mxu0 %v1905
        %v2126 = vpop.f32.mrb[0].mxu0
        %v2127 = vadd.f32 %v1812, %v2126
        %v2128 = vpop.f32.mrb[0].mxu0
        %2129 = vmatprep.mubr.f32.mxu0 0.0
        %2130 = vmatmul.mubr.f32.gmra.mrb[0].mxu0 %v1908
        %v2131 = vpop.f32.mrb[0].mxu0
        %v2132 = vadd.f32 %v1812, %v2131
        %v2133 = vpop.f32.mrb[0].mxu0
        %2134 = vdwg.mxu0
        %2135 = vst.msk [vmem:[%s394] sm:$0xff] %vm403, %v1977
        %2136 = vst.msk [vmem:[%s394 + $0x8] sm:$0xff] %vm403, %v1982
        %2137 = vst.msk [vmem:[%s394 + $0x10] sm:$0xff] %vm403, %v1987
        %2138 = vst.msk [vmem:[%s394 + $0x18] sm:$0xff] %vm403, %v1992
        %2139 = vst.msk [vmem:[%s394 + $0x20] sm:$0xff] %vm403, %v1997
        %2140 = vst.msk [vmem:[%s394 + $0x28] sm:$0xff] %vm403, %v2002
        %2141 = vst.msk [vmem:[%s394 + $0x30] sm:$0xff] %vm403, %v2007
        %2142 = vst.msk [vmem:[%s394 + $0x38] sm:$0xff] %vm403, %v2012
        %2143 = vst.msk [vmem:[%s394 + $0x40] sm:$0xff] %vm403, %v2017
        %2144 = vst.msk [vmem:[%s394 + $0x48] sm:$0xff] %vm403, %v2022
        %2145 = vst.msk [vmem:[%s394 + $0x50] sm:$0xff] %vm403, %v2027
        %2146 = vst.msk [vmem:[%s394 + $0x58] sm:$0xff] %vm403, %v2032
        %2147 = vst.msk [vmem:[%s394 + $0x60] sm:$0xff] %vm403, %v2037
        %2148 = vst.msk [vmem:[%s394 + $0x68] sm:$0xff] %vm403, %v2042
        %2149 = vst.msk [vmem:[%s394 + $0x70] sm:$0xff] %vm403, %v2047
        %2150 = vst.msk [vmem:[%s394 + $0x78] sm:$0xff] %vm403, %v2052
        %2151 = vst.msk [vmem:[%s394 + $0x80] sm:$0xff] %vm403, %v2057
        %2152 = vst.msk [vmem:[%s394 + $0x88] sm:$0xff] %vm403, %v2062
        %2153 = vst.msk [vmem:[%s394 + $0x90] sm:$0xff] %vm403, %v2067
        %2154 = vst.msk [vmem:[%s394 + $0x98] sm:$0xff] %vm403, %v2072
        %2155 = vst.msk [vmem:[%s394 + $0xa0] sm:$0xff] %vm403, %v2077
        %2156 = vst.msk [vmem:[%s394 + $0xa8] sm:$0xff] %vm403, %v2082
        %2157 = vst.msk [vmem:[%s394 + $0xb0] sm:$0xff] %vm403, %v2087
        %2158 = vst.msk [vmem:[%s394 + $0xb8] sm:$0xff] %vm403, %v2092
        %2159 = vst.msk [vmem:[%s394 + $0xc0] sm:$0xff] %vm403, %v2097
        %2160 = vst.msk [vmem:[%s394 + $0xc8] sm:$0xff] %vm403, %v2102
        %2161 = vst.msk [vmem:[%s394 + $0xd0] sm:$0xff] %vm403, %v2107
        %2162 = vst.msk [vmem:[%s394 + $0xd8] sm:$0xff] %vm403, %v2112
        %2163 = vst.msk [vmem:[%s394 + $0xe0] sm:$0xff] %vm403, %v2117
        %2164 = vst.msk [vmem:[%s394 + $0xe8] sm:$0xff] %vm403, %v2122
        %2165 = vst.msk [vmem:[%s394 + $0xf0] sm:$0xff] %vm403, %v2127
        %2166 = vst.msk [vmem:[%s394 + $0xf8] sm:$0xff] %vm403, %v2132
        %s2167 = sand.u32 %s230, 1
        %s2168 = scalar_lea.sflag [#allocation4], %s2167
        %s2169 = sand.u32 %s230, 1
        %s2170 = smul.addr %s2169, 256
        %s2171 = scalar_lea.vmem [#allocation10], %s2170
        // Predicated region
        $region73: #{tpu_custom_call.1} parent=55 // pred_check
          %p2172 = pneg %p240
        $region74: #{tpu_custom_call.1} parent=55 // pred_check_branch
          %2174 = sbr.rel (%p2172) target = $region76
        $region75: #{tpu_custom_call.1} parent=55 // pred_region
          %s2176 = ssub.s32 4096, 4096
          %2177 = vsyncadd %s2168, %s2176
          %s2178 = smul.addr %s28, 32
          %s2179 = smul.addr %s2178, 128
          %s2180 = scalar_lea.hbm %s9, %s2179
          %s2181 = sshll.u32 %s2171, 4
          %s2182 = int_to_ptr.vmem [resolvable:$true] %s2181
          %2187 = dma.vmem_to_hbm [thread:$0]  %s2182, 4096, %s2180, %s2168, 128, 128, 8
        $region76: #{tpu_custom_call.1} parent=55 // pred_fallthru
          _
      $region56: #{tpu_custom_call.1} parent=5 // pred_fallthru
        _
      %p2188 = scmp.le.s32.totalorder 2, %s23
      // Predicated region
      $region77: #{tpu_custom_call.1} parent=5 // pred_check
        %p2189 = pneg %p2188
      $region78: #{tpu_custom_call.1} parent=5 // pred_check_branch
        %2191 = sbr.rel (%p2189) target = $region80
      $region79: #{tpu_custom_call.1} parent=5 // pred_region
        %s2192 = ssub.s32 %s23, 2
        // Predicated region
        $region81: #{tpu_custom_call.1} parent=79 // pred_check
          %p2193 = pneg %p246
        $region82: #{tpu_custom_call.1} parent=79 // pred_check_branch
          %2195 = sbr.rel (%p2193) target = $region84
        $region83: #{tpu_custom_call.1} parent=79 // pred_region
          %s2196 = sand.u32 %s231, 1
          %s2197 = scalar_lea.sflag [#allocation4], %s2196
          %s2198 = sand.u32 %s231, 1
          %s2199 = smul.addr %s2198, 256
          %s2200 = scalar_lea.vmem [#allocation10], %s2199
          %2201 = dma.done %s2197, 4096
        $region84: #{tpu_custom_call.1} parent=79 // pred_fallthru
          _
      $region80: #{tpu_custom_call.1} parent=5 // pred_fallthru
        _
    $region6: #{tpu_custom_call.1} parent=1 // loop_footer
      %s27 = sadd.s32 1, %s23
    $region7: #{tpu_custom_call.1} parent=1 // loop_footer_branch
      %22 = sbr.rel target = $region3
    $region8: #{tpu_custom_call.1} parent=1 // loop_exit
      _
    %2202 = vsyncpa [#allocation3], 1
    %s2203 = scalar_lea.sflag [#allocation3], 1
    %2204 = vsyncpa %s2203, 1
    %2205 = vsyncpa [#allocation6], 1
    %2206 = vsyncpa [#allocation9], 1
    %2207 = vsyncpa [#allocation4], 1
    %s2208 = scalar_lea.sflag [#allocation4], 1
    %2209 = vsyncpa %s2208, 1

</llo_original>
